<compile_context>
chip_gen: v7x
topology: tpu7x:2x2x1
jax: 0.10.0
libtpu: 0.0.40
codegen_flags: <defaults>
</compile_context>

<pallas_src>
import functools

import jax
import jax.numpy as jnp
from jax import lax
from jax.experimental import pallas as pl
from jax.experimental.pallas import tpu as pltpu


def _round_up(x, m):
    return ((x + m - 1) // m) * m


def _make_conv_kernel(C, Wp, LT):
    """3x3 conv as ONE (Cout, 9C) x (9C, LT) MXU matmul on lane-shifted views."""
    offs = tuple(ky * Wp + kx for ky in range(3) for kx in range(3))

    def kernel(x_ref, w_ref, b_ref, o_ref, s_ref):
        # x_ref: (C, LT + HALO)  bf16, channel-major row-padded flat images
        # w_ref: (Cout, 9*C)     bf16, resident merged conv taps
        # b_ref: (Cout, 1)       f32,  resident bias
        # o_ref: (Cout, LT)      f32,  flat output, same per-image layout
        # s_ref: (9*C, LT)       bf16 scratch: stacked (implicit im2col) operand
        for t, off in enumerate(offs):
            # Each tap is a constant lane shift; the per-block halo keeps the
            # full-LT shifted read in bounds (no masked tail handling needed).
            s_ref[t * C:(t + 1) * C, :] = x_ref[:, off:off + LT]
        acc = jnp.dot(w_ref[...], s_ref[...],
                      preferred_element_type=jnp.float32)
        # Single f32 bias add, then one unmasked lane-dense store of the block.
        o_ref[...] = (acc + b_ref[...]).astype(o_ref.dtype)

    return kernel


def conv2d_3x3_pallas(x_nchw, weight, bias, *, target_lanes=32768):
    """3x3 / stride 1 / padding 1 Conv2d.  x: (N,C,H,W), weight: (Cout,C,3,3)."""
    N, C, H, W = x_nchw.shape
    Cout = weight.shape[0]
    Hp, Wp = H + 2, W + 2
    l_img = Hp * Wp                          # flat padded-image length
    max_shift = 2 * Wp + 2                   # largest tap offset (ky = kx = 2)
    Sx = _round_up(l_img + max_shift, 128)   # 128-aligned per-image segment
    HALO = _round_up(max_shift, 128)         # per-block halo -> in-bounds reads

    # Big lane-dense grid blocks; small problems run as a single block (no
    # forced split on 1-TC chips), large ones get a (preferably even) count.
    G = min(N, max(1, target_lanes // Sx))   # images per grid block (target)
    nblocks = pl.cdiv(N, G)
    G = pl.cdiv(N, nblocks)                  # rebalance so batch padding ~ 0
    if nblocks > 1 and nblocks % 2:
        nb_alt = pl.cdiv(N, pl.cdiv(N, nblocks + 1))
        if nb_alt % 2 == 0:                  # even count keeps v7x's 2 TCs busy
            nblocks = nb_alt
            G = pl.cdiv(N, nblocks)
    Npad = nblocks * G
    LT = G * Sx                              # output lane tile (multiple of 128)
    # TODO(synk): for very large H*W (C*LT*bytes approaching VMEM) also tile
    # within an image with a halo; unnecessary at these sizes.

    # Channel-major flat bf16 layout with a per-block halo:
    # xf[c, blk*(LT+HALO) + g*Sx + i*Wp + j] = padded_x[blk*G + g, c, i, j].
    xp = jnp.pad(x_nchw, ((0, Npad - N), (0, 0), (1, 1), (1, 1)))
    xf = jnp.transpose(xp, (1, 0, 2, 3)).reshape(C, Npad, l_img)
    xf = jnp.pad(xf, ((0, 0), (0, 0), (0, Sx - l_img)))
    xf = xf.reshape(C, nblocks, LT)
    xf = jnp.pad(xf, ((0, 0), (0, 0), (0, HALO)))
    xf = xf.reshape(C, nblocks * (LT + HALO)).astype(jnp.bfloat16)
    # TODO(synk): fuse this packing (and the un-flatten below) into the kernel
    # via manual make_async_copy of unpadded (C, H*W) rows into a pre-zeroed
    # VMEM block to drop the extra full-tensor HBM layout passes.

    # Merged taps: w36[co, (ky*3+kx)*C + c] = weight[co, c, ky, kx].
    w36 = jnp.transpose(weight, (0, 2, 3, 1)).reshape(Cout, 9 * C)
    w36 = w36.astype(jnp.bfloat16)
    b2 = bias.reshape(Cout, 1).astype(jnp.float32)

    kernel = _make_conv_kernel(C, Wp, LT)
    yf = pl.pallas_call(
        kernel,
        out_shape=jax.ShapeDtypeStruct((Cout, nblocks * LT), x_nchw.dtype),
        grid_spec=pltpu.PrefetchScalarGridSpec(
            num_scalar_prefetch=0,
            grid=(nblocks,),
            in_specs=[
                pl.BlockSpec((C, LT + HALO), lambda t: (0, t)),
                pl.BlockSpec((Cout, 9 * C), lambda t: (0, 0)),   # resident
                pl.BlockSpec((Cout, 1), lambda t: (0, 0)),       # resident
            ],
            out_specs=pl.BlockSpec((Cout, LT), lambda t: (0, t)),
            scratch_shapes=[pltpu.VMEM((9 * C, LT), jnp.bfloat16)],
        ),
        compiler_params=pltpu.CompilerParams(
            dimension_semantics=("parallel",),
            vmem_limit_bytes=32 * 1024 * 1024,
        ),
    )(xf, w36, b2)

    # Un-flatten: drop per-image tail, batch pad, padded rows/cols; to NCHW.
    y = yf.reshape(Cout, Npad, Sx)[:, :N, :l_img].reshape(Cout, N, Hp, Wp)
    return jnp.transpose(y[:, :, :H, :W], (1, 0, 2, 3))   # (N, Cout, H, W)


@functools.partial(jax.jit, static_argnames=("batch_first",))
def time_distributed_conv(x, weight, bias, batch_first=True):
    """x: (B, T, C, H, W) -> (B, T, Cout, H, W) (batch_first=True)."""
    B, T, C, H, W = x.shape
    c_in = x.reshape(B * T, C, H, W)                 # fold (B, T)
    c_out = conv2d_3x3_pallas(c_in, weight, bias)    # inner module
    r_in = c_out.reshape(B, T, c_out.shape[1], c_out.shape[2], c_out.shape[3])
    if not batch_first:
        # TODO(synk): the original code's permute(1, 0, 2) on a 5-D tensor would
        # raise in PyTorch; interpreting the intent as swapping batch/time axes.
        r_in = jnp.swapaxes(r_in, 0, 1)
    return r_in


if __name__ == "__main__":
    # Small, deterministic shapes consistent with the forward signature.
    B, T, C, H, W = 2, 3, 4, 16, 16
    Cout = 8

    key = jax.random.PRNGKey(0)
    kx_, kw_, kb_ = jax.random.split(key, 3)
    x = jax.random.normal(kx_, (B, T, C, H, W), dtype=jnp.float32)
    weight = jax.random.normal(kw_, (Cout, C, 3, 3), dtype=jnp.float32) * 0.1
    bias = jax.random.normal(kb_, (Cout,), dtype=jnp.float32) * 0.1

    out = time_distributed_conv(x, weight, bias, batch_first=True)
    out = jax.block_until_ready(out)

    # Reference: same conv on bf16-rounded inputs (the kernel feeds the MXU
    # bf16 and accumulates in f32), computed with XLA's conv at high precision.
    xb = x.astype(jnp.bfloat16).astype(jnp.float32)
    wb = weight.astype(jnp.bfloat16).astype(jnp.float32)
    ref = lax.conv_general_dilated(
        xb.reshape(B * T, C, H, W), wb,
        window_strides=(1, 1), padding="SAME",
        dimension_numbers=("NCHW", "OIHW", "NCHW"),
        precision=lax.Precision.HIGHEST,
        preferred_element_type=jnp.float32,
    ) + bias.reshape(1, Cout, 1, 1)
    ref = ref.reshape(B, T, Cout, H, W)

    assert out.shape == (B, T, Cout, H, W), out.shape
    max_err = float(jnp.abs(out - ref).max())
    assert max_err < 1e-3, max_err
    print("KERNEL_OK")
</pallas_src>

<mosaic_0001>
module attributes {stable_mosaic.version = 11 : i64} {
  func.func @kernel(%arg0: i32, %arg1: memref<4x2432xbf16, #tpu.memory_space<vmem>>, %arg2: memref<8x36xbf16, #tpu.memory_space<vmem>>, %arg3: memref<8x1xf32, #tpu.memory_space<vmem>>, %arg4: memref<8x2304xf32, #tpu.memory_space<vmem>>, %arg5: memref<36x2304xbf16, #tpu.memory_space<vmem>>) attributes {dimension_semantics = [#tpu.dimension_semantics<parallel>], iteration_bounds = array<i64: 1>, scalar_prefetch = 0 : i64, scratch_operands = 1 : i64, tpu.core_type = #tpu.core_type<tc>, window_params = [{transform_indices = @transform_0, window_bounds = array<i64: 4, 2432>}, {pipeline_mode = #tpu.pipeline_mode<synchronous>, transform_indices = @transform_1, window_bounds = array<i64: 8, 36>}, {pipeline_mode = #tpu.pipeline_mode<synchronous>, transform_indices = @transform_2, window_bounds = array<i64: 8, 1>}, {transform_indices = @transform_3, window_bounds = array<i64: 8, 2304>}]} {
    %c0 = arith.constant 0 : index
    %c0_0 = arith.constant 0 : index
    %0 = vector.load %arg1[%c0, %c0_0] : memref<4x2432xbf16, #tpu.memory_space<vmem>>, vector<4x2304xbf16>
    %c0_1 = arith.constant 0 : index
    %c0_2 = arith.constant 0 : index
    %1 = vector.load %arg5[%c0_1, %c0_2] : memref<36x2304xbf16, #tpu.memory_space<vmem>>, vector<4x2304xbf16>
    tpu.vector_store %arg5[%c0_1, %c0_2], %0 {strides = array<i32>} : memref<36x2304xbf16, #tpu.memory_space<vmem>>, vector<4x2304xbf16>,
    %c0_3 = arith.constant 0 : index
    %c1 = arith.constant 1 : index
    %2 = vector.load %arg1[%c0_3, %c1] : memref<4x2432xbf16, #tpu.memory_space<vmem>>, vector<4x2304xbf16>
    %c4 = arith.constant 4 : index
    %c0_4 = arith.constant 0 : index
    %3 = vector.load %arg5[%c4, %c0_4] : memref<36x2304xbf16, #tpu.memory_space<vmem>>, vector<4x2304xbf16>
    tpu.vector_store %arg5[%c4, %c0_4], %2 {strides = array<i32>} : memref<36x2304xbf16, #tpu.memory_space<vmem>>, vector<4x2304xbf16>,
    %c0_5 = arith.constant 0 : index
    %c2 = arith.constant 2 : index
    %4 = vector.load %arg1[%c0_5, %c2] : memref<4x2432xbf16, #tpu.memory_space<vmem>>, vector<4x2304xbf16>
    %c8 = arith.constant 8 : index
    %c0_6 = arith.constant 0 : index
    %5 = vector.load %arg5[%c8, %c0_6] : memref<36x2304xbf16, #tpu.memory_space<vmem>>, vector<4x2304xbf16>
    tpu.vector_store %arg5[%c8, %c0_6], %4 {strides = array<i32>} : memref<36x2304xbf16, #tpu.memory_space<vmem>>, vector<4x2304xbf16>,
    %c0_7 = arith.constant 0 : index
    %c18 = arith.constant 18 : index
    %6 = vector.load %arg1[%c0_7, %c18] : memref<4x2432xbf16, #tpu.memory_space<vmem>>, vector<4x2304xbf16>
    %c12 = arith.constant 12 : index
    %c0_8 = arith.constant 0 : index
    %7 = vector.load %arg5[%c12, %c0_8] : memref<36x2304xbf16, #tpu.memory_space<vmem>>, vector<4x2304xbf16>
    tpu.vector_store %arg5[%c12, %c0_8], %6 {strides = array<i32>} : memref<36x2304xbf16, #tpu.memory_space<vmem>>, vector<4x2304xbf16>,
    %c0_9 = arith.constant 0 : index
    %c19 = arith.constant 19 : index
    %8 = vector.load %arg1[%c0_9, %c19] : memref<4x2432xbf16, #tpu.memory_space<vmem>>, vector<4x2304xbf16>
    %c16 = arith.constant 16 : index
    %c0_10 = arith.constant 0 : index
    %9 = vector.load %arg5[%c16, %c0_10] : memref<36x2304xbf16, #tpu.memory_space<vmem>>, vector<4x2304xbf16>
    tpu.vector_store %arg5[%c16, %c0_10], %8 {strides = array<i32>} : memref<36x2304xbf16, #tpu.memory_space<vmem>>, vector<4x2304xbf16>,
    %c0_11 = arith.constant 0 : index
    %c20 = arith.constant 20 : index
    %10 = vector.load %arg1[%c0_11, %c20] : memref<4x2432xbf16, #tpu.memory_space<vmem>>, vector<4x2304xbf16>
    %c20_12 = arith.constant 20 : index
    %c0_13 = arith.constant 0 : index
    %11 = vector.load %arg5[%c20_12, %c0_13] : memref<36x2304xbf16, #tpu.memory_space<vmem>>, vector<4x2304xbf16>
    tpu.vector_store %arg5[%c20_12, %c0_13], %10 {strides = array<i32>} : memref<36x2304xbf16, #tpu.memory_space<vmem>>, vector<4x2304xbf16>,
    %c0_14 = arith.constant 0 : index
    %c36 = arith.constant 36 : index
    %12 = vector.load %arg1[%c0_14, %c36] : memref<4x2432xbf16, #tpu.memory_space<vmem>>, vector<4x2304xbf16>
    %c24 = arith.constant 24 : index
    %c0_15 = arith.constant 0 : index
    %13 = vector.load %arg5[%c24, %c0_15] : memref<36x2304xbf16, #tpu.memory_space<vmem>>, vector<4x2304xbf16>
    tpu.vector_store %arg5[%c24, %c0_15], %12 {strides = array<i32>} : memref<36x2304xbf16, #tpu.memory_space<vmem>>, vector<4x2304xbf16>,
    %c0_16 = arith.constant 0 : index
    %c37 = arith.constant 37 : index
    %14 = vector.load %arg1[%c0_16, %c37] : memref<4x2432xbf16, #tpu.memory_space<vmem>>, vector<4x2304xbf16>
    %c28 = arith.constant 28 : index
    %c0_17 = arith.constant 0 : index
    %15 = vector.load %arg5[%c28, %c0_17] : memref<36x2304xbf16, #tpu.memory_space<vmem>>, vector<4x2304xbf16>
    tpu.vector_store %arg5[%c28, %c0_17], %14 {strides = array<i32>} : memref<36x2304xbf16, #tpu.memory_space<vmem>>, vector<4x2304xbf16>,
    %c0_18 = arith.constant 0 : index
    %c38 = arith.constant 38 : index
    %16 = vector.load %arg1[%c0_18, %c38] : memref<4x2432xbf16, #tpu.memory_space<vmem>>, vector<4x2304xbf16>
    %c32 = arith.constant 32 : index
    %c0_19 = arith.constant 0 : index
    %17 = vector.load %arg5[%c32, %c0_19] : memref<36x2304xbf16, #tpu.memory_space<vmem>>, vector<4x2304xbf16>
    tpu.vector_store %arg5[%c32, %c0_19], %16 {strides = array<i32>} : memref<36x2304xbf16, #tpu.memory_space<vmem>>, vector<4x2304xbf16>,
    %c0_20 = arith.constant 0 : index
    %c0_21 = arith.constant 0 : index
    %18 = vector.load %arg2[%c0_20, %c0_21] : memref<8x36xbf16, #tpu.memory_space<vmem>>, vector<8x36xbf16>
    %c0_22 = arith.constant 0 : index
    %c0_23 = arith.constant 0 : index
    %19 = vector.load %arg5[%c0_22, %c0_23] : memref<36x2304xbf16, #tpu.memory_space<vmem>>, vector<36x2304xbf16>
    %cst = arith.constant dense<0.000000e+00> : vector<8x2304xf32>
    %20 = tpu.matmul %18, %19, %cst {dimension_numbers = #tpu.dot_dimension_numbers<[1], [0], [0], [1], [0, 0, 1, 1], [], []>} : vector<8x36xbf16>, vector<36x2304xbf16>, vector<8x2304xf32> -> vector<8x2304xf32>
    %c0_24 = arith.constant 0 : index
    %c0_25 = arith.constant 0 : index
    %21 = vector.load %arg3[%c0_24, %c0_25] : memref<8x1xf32, #tpu.memory_space<vmem>>, vector<8x1xf32>
    %22 = vector.broadcast %21 : vector<8x1xf32> to vector<8x2304xf32>
    %23 = arith.addf %20, %22 : vector<8x2304xf32>
    %c0_26 = arith.constant 0 : index
    %c0_27 = arith.constant 0 : index
    %24 = vector.load %arg4[%c0_26, %c0_27] : memref<8x2304xf32, #tpu.memory_space<vmem>>, vector<8x2304xf32>
    tpu.vector_store %arg4[%c0_26, %c0_27], %23 {strides = array<i32>} : memref<8x2304xf32, #tpu.memory_space<vmem>>, vector<8x2304xf32>,
    return
  }
  func.func @transform_0(%arg0: i32) -> (i32, i32) {
    %c0_i32 = arith.constant 0 : i32
    %c0_i32_0 = arith.constant 0 : i32
    return %c0_i32, %arg0 : i32, i32
  }
  func.func @transform_1(%arg0: i32) -> (i32, i32) {
    %c0_i32 = arith.constant 0 : i32
    %c0_i32_0 = arith.constant 0 : i32
    %c0_i32_1 = arith.constant 0 : i32
    return %c0_i32, %c0_i32_0 : i32, i32
  }
  func.func @transform_2(%arg0: i32) -> (i32, i32) {
    %c0_i32 = arith.constant 0 : i32
    %c0_i32_0 = arith.constant 0 : i32
    %c0_i32_1 = arith.constant 0 : i32
    return %c0_i32, %c0_i32_0 : i32, i32
  }
  func.func @transform_3(%arg0: i32) -> (i32, i32) {
    %c0_i32 = arith.constant 0 : i32
    %c0_i32_0 = arith.constant 0 : i32
    return %c0_i32, %arg0 : i32, i32
  }
}

</mosaic_0001>

<llo_original>
// kernel: time_distributed_conv.1
$region0: #{time_distributed_conv.1}
  #allocation0 [shape = 'u32[]', space=smem, size = 0x4, offset = 0x4, fixed_abs, tag = 'smem constant byte address 0x4 - core index']
  #allocation1 [shape = 'u32[144,128]{1,0:T(1,128)}', space=vmem, size = 0x12000, scoped, tag = 'internal scratch']
  #allocation2 [shape = 'bf16[36,2304]{1,0:T(8,128)(2,1)}', space=vmem, size = 0x2d000, scoped, tag = 'scratch operand']
  %s0 = inlined_call_operand.vmem [shape: bf16[4,2432], index: 0, kind: input, shape index: {}]
  %s1 = inlined_call_operand.vmem [shape: bf16[8,36], index: 1, kind: input, shape index: {}]
  %s2 = inlined_call_operand.vmem [shape: f32[8,1], index: 2, kind: input, shape index: {}]
  %s3 = inlined_call_operand.vmem [shape: f32[8,2304], index: 3, kind: output, shape index: {}]
  %s4 = sld [smem:[#allocation0]]
  $region22: #{time_distributed_conv.1} parent=0
    _
  %s6 = ssub.s32 1, %s4
  %s7 = scalar_select 0, %s6, %s4
  // Predicated region
  $region2: #{time_distributed_conv.1} parent=0 // pred_check
    _
  $region3: #{time_distributed_conv.1} parent=0 // pred_check_branch
    %9 = sbr.rel (0) target = $region5
  $region4: #{time_distributed_conv.1} parent=0 // pred_region
    _
  $region5: #{time_distributed_conv.1} parent=0 // pred_fallthru
    _
  // Predicated region
  $region6: #{time_distributed_conv.1} parent=0 // pred_check
    _
  $region7: #{time_distributed_conv.1} parent=0 // pred_check_branch
    %11 = sbr.rel (0) target = $region9
  $region8: #{time_distributed_conv.1} parent=0 // pred_region
    _
  $region9: #{time_distributed_conv.1} parent=0 // pred_fallthru
    _
  // Predicated region
  $region10: #{time_distributed_conv.1} parent=0 // pred_check
    _
  $region11: #{time_distributed_conv.1} parent=0 // pred_check_branch
    %13 = sbr.rel (0) target = $region13
  $region12: #{time_distributed_conv.1} parent=0 // pred_region
    _
  $region13: #{time_distributed_conv.1} parent=0 // pred_fallthru
    _
  %v15 = vld [vmem:[%s0] sm:$0xff]
  %v16 = vld [vmem:[%s0 + $0x8] sm:$0xff]
  %v17 = vld [vmem:[%s0 + $0x10] sm:$0xff]
  %v18 = vld [vmem:[%s0 + $0x18] sm:$0xff]
  %v19 = vld [vmem:[%s0 + $0x20] sm:$0xf]
  %v25 = vcombine.high %v15, %v15
  %v27 = vunpack.c.l.s4 1983009808
  %v28 = vunpack.c.0.s8 %v27
  %v29 = vlaneseq
  %v30 = vshrl.u32 %v29, 7
  %v31 = vsub.s32 %v28, %v30
  %v32 = vrot.slane %v15, %v31
  %v34 = vunpack.c.l.s4 1983009808
  %v35 = vunpack.c.0.s8 %v34
  %v36 = vlaneseq
  %v37 = vshrl.u32 %v36, 7
  %v38 = vsub.s32 %v35, %v37
  %v39 = vrot.slane %v25, %v38
  %v40 = vcombine.high %v16, %v16
  %v42 = vunpack.c.l.s4 1983009808
  %v43 = vunpack.c.0.s8 %v42
  %v44 = vlaneseq
  %v45 = vshrl.u32 %v44, 7
  %v46 = vsub.s32 %v43, %v45
  %v47 = vrot.slane %v16, %v46
  %v49 = vunpack.c.l.s4 1983009808
  %v50 = vunpack.c.0.s8 %v49
  %v51 = vlaneseq
  %v52 = vshrl.u32 %v51, 7
  %v53 = vsub.s32 %v50, %v52
  %v54 = vrot.slane %v40, %v53
  %v55 = vcombine.high %v17, %v17
  %v57 = vunpack.c.l.s4 1983009808
  %v58 = vunpack.c.0.s8 %v57
  %v59 = vlaneseq
  %v60 = vshrl.u32 %v59, 7
  %v61 = vsub.s32 %v58, %v60
  %v62 = vrot.slane %v17, %v61
  %v64 = vunpack.c.l.s4 1983009808
  %v65 = vunpack.c.0.s8 %v64
  %v66 = vlaneseq
  %v67 = vshrl.u32 %v66, 7
  %v68 = vsub.s32 %v65, %v67
  %v69 = vrot.slane %v55, %v68
  %v70 = vcombine.high %v18, %v18
  %v72 = vunpack.c.l.s4 1983009808
  %v73 = vunpack.c.0.s8 %v72
  %v74 = vlaneseq
  %v75 = vshrl.u32 %v74, 7
  %v76 = vsub.s32 %v73, %v75
  %v77 = vrot.slane %v18, %v76
  %v79 = vunpack.c.l.s4 1983009808
  %v80 = vunpack.c.0.s8 %v79
  %v81 = vlaneseq
  %v82 = vshrl.u32 %v81, 7
  %v83 = vsub.s32 %v80, %v82
  %v84 = vrot.slane %v70, %v83
  %v86 = vunpack.c.l.s4 1983009808
  %v87 = vunpack.c.0.s8 %v86
  %v88 = vlaneseq
  %v89 = vshrl.u32 %v88, 7
  %v90 = vsub.s32 %v87, %v89
  %v91 = vrot.slane %v19, %v90
  %101 = vst [vmem:[#allocation2] sm:$0x33] %v32
  %102 = vst [vmem:[#allocation2 + $0x8] sm:$0x33] %v39
  %103 = vst [vmem:[#allocation2 + $0x10] sm:$0x33] %v47
  %104 = vst [vmem:[#allocation2 + $0x18] sm:$0x33] %v54
  %105 = vst [vmem:[#allocation2 + $0x20] sm:$0x33] %v62
  %106 = vst [vmem:[#allocation2 + $0x28] sm:$0x33] %v69
  %107 = vst [vmem:[#allocation2 + $0x30] sm:$0x33] %v77
  %108 = vst [vmem:[#allocation2 + $0x38] sm:$0x33] %v84
  %109 = vst [vmem:[#allocation2 + $0x40] sm:$0x33] %v91
  %v110 = vld [vmem:[%s0] sm:$0xff]
  %v111 = vld [vmem:[%s0 + $0x8] sm:$0xff]
  %v112 = vld [vmem:[%s0 + $0x10] sm:$0xff]
  %v113 = vld [vmem:[%s0 + $0x18] sm:$0xff]
  %v114 = vld [vmem:[%s0 + $0x20] sm:$0x3f]
  %v120 = vcombine.low %v110, %v110
  %v122 = vunpack.c.l.s4 1983009808
  %v123 = vunpack.c.0.s8 %v122
  %v124 = vlaneseq
  %v125 = vshrl.u32 %v124, 7
  %v126 = vsub.s32 %v123, %v125
  %v127 = vrot.slane %v120, %v126
  %v129 = vunpack.c.l.s4 1983009808
  %v130 = vunpack.c.0.s8 %v129
  %v131 = vlaneseq
  %v132 = vshrl.u32 %v131, 7
  %v133 = vsub.s32 %v130, %v132
  %v134 = vrot.slane %v110, %v133
  %v135 = vcombine.low %v111, %v111
  %v137 = vunpack.c.l.s4 1983009808
  %v138 = vunpack.c.0.s8 %v137
  %v139 = vlaneseq
  %v140 = vshrl.u32 %v139, 7
  %v141 = vsub.s32 %v138, %v140
  %v142 = vrot.slane %v135, %v141
  %v144 = vunpack.c.l.s4 1983009808
  %v145 = vunpack.c.0.s8 %v144
  %v146 = vlaneseq
  %v147 = vshrl.u32 %v146, 7
  %v148 = vsub.s32 %v145, %v147
  %v149 = vrot.slane %v111, %v148
  %v150 = vcombine.low %v112, %v112
  %v152 = vunpack.c.l.s4 1983009808
  %v153 = vunpack.c.0.s8 %v152
  %v154 = vlaneseq
  %v155 = vshrl.u32 %v154, 7
  %v156 = vsub.s32 %v153, %v155
  %v157 = vrot.slane %v150, %v156
  %v159 = vunpack.c.l.s4 1983009808
  %v160 = vunpack.c.0.s8 %v159
  %v161 = vlaneseq
  %v162 = vshrl.u32 %v161, 7
  %v163 = vsub.s32 %v160, %v162
  %v164 = vrot.slane %v112, %v163
  %v165 = vcombine.low %v113, %v113
  %v167 = vunpack.c.l.s4 1983009808
  %v168 = vunpack.c.0.s8 %v167
  %v169 = vlaneseq
  %v170 = vshrl.u32 %v169, 7
  %v171 = vsub.s32 %v168, %v170
  %v172 = vrot.slane %v165, %v171
  %v174 = vunpack.c.l.s4 1983009808
  %v175 = vunpack.c.0.s8 %v174
  %v176 = vlaneseq
  %v177 = vshrl.u32 %v176, 7
  %v178 = vsub.s32 %v175, %v177
  %v179 = vrot.slane %v113, %v178
  %v180 = vcombine.low %v114, %v114
  %v182 = vunpack.c.l.s4 1983009808
  %v183 = vunpack.c.0.s8 %v182
  %v184 = vlaneseq
  %v185 = vshrl.u32 %v184, 7
  %v186 = vsub.s32 %v183, %v185
  %v187 = vrot.slane %v180, %v186
  %v189 = vunpack.c.l.s4 1983009808
  %v190 = vunpack.c.0.s8 %v189
  %v191 = vlaneseq
  %v192 = vshrl.u32 %v191, 7
  %v193 = vsub.s32 %v190, %v192
  %v194 = vrot.slane %v114, %v193
  %195 = vrot.lane.b32.xlu0 %v127, 127
  %v196 = vpop.permute.xlu0 %195
  %197 = vrot.lane.b32.xlu0 %v134, 127
  %v198 = vpop.permute.xlu0 %197
  %199 = vrot.lane.b32.xlu0 %v142, 127
  %v200 = vpop.permute.xlu0 %199
  %201 = vrot.lane.b32.xlu0 %v149, 127
  %v202 = vpop.permute.xlu0 %201
  %203 = vrot.lane.b32.xlu0 %v157, 127
  %v204 = vpop.permute.xlu0 %203
  %205 = vrot.lane.b32.xlu0 %v164, 127
  %v206 = vpop.permute.xlu0 %205
  %207 = vrot.lane.b32.xlu0 %v172, 127
  %v208 = vpop.permute.xlu0 %207
  %209 = vrot.lane.b32.xlu0 %v179, 127
  %v210 = vpop.permute.xlu0 %209
  %211 = vrot.lane.b32.xlu0 %v187, 127
  %v212 = vpop.permute.xlu0 %211
  %213 = vrot.lane.b32.xlu0 %v194, 127
  %v214 = vpop.permute.xlu0 %213
  %v215 = vrot.slane %v196, 4
  %v216 = vrot.slane %v198, 4
  %v217 = vrot.slane %v200, 4
  %v218 = vrot.slane %v202, 4
  %v219 = vrot.slane %v204, 4
  %v220 = vrot.slane %v206, 4
  %v221 = vrot.slane %v208, 4
  %v222 = vrot.slane %v210, 4
  %v223 = vrot.slane %v212, 4
  %v224 = vrot.slane %v214, 4
  %vm225 = vcmask 1043456
  %v226 = vsel %vm225, %v215, %v216
  %vm227 = vcmask 1039360
  %v228 = vsel %vm227, %v196, %v226
  %v229 = vsel %vm225, %v216, %v217
  %v230 = vsel %vm227, %v198, %v229
  %v231 = vsel %vm225, %v217, %v218
  %v232 = vsel %vm227, %v200, %v231
  %v233 = vsel %vm225, %v218, %v219
  %v234 = vsel %vm227, %v202, %v233
  %v235 = vsel %vm225, %v219, %v220
  %v236 = vsel %vm227, %v204, %v235
  %v237 = vsel %vm225, %v220, %v221
  %v238 = vsel %vm227, %v206, %v237
  %v239 = vsel %vm225, %v221, %v222
  %v240 = vsel %vm227, %v208, %v239
  %v241 = vsel %vm225, %v222, %v223
  %v242 = vsel %vm227, %v210, %v241
  %v243 = vsel %vm225, %v223, %v224
  %v244 = vsel %vm227, %v212, %v243
  %254 = vst [vmem:[#allocation2] sm:$0xcc] %v228
  %255 = vst [vmem:[#allocation2 + $0x8] sm:$0xcc] %v230
  %256 = vst [vmem:[#allocation2 + $0x10] sm:$0xcc] %v232
  %257 = vst [vmem:[#allocation2 + $0x18] sm:$0xcc] %v234
  %258 = vst [vmem:[#allocation2 + $0x20] sm:$0xcc] %v236
  %259 = vst [vmem:[#allocation2 + $0x28] sm:$0xcc] %v238
  %260 = vst [vmem:[#allocation2 + $0x30] sm:$0xcc] %v240
  %261 = vst [vmem:[#allocation2 + $0x38] sm:$0xcc] %v242
  %262 = vst [vmem:[#allocation2 + $0x40] sm:$0xcc] %v244
  %v263 = vld [vmem:[%s0] sm:$0xff]
  %v264 = vld [vmem:[%s0 + $0x8] sm:$0xff]
  %v265 = vld [vmem:[%s0 + $0x10] sm:$0xff]
  %v266 = vld [vmem:[%s0 + $0x18] sm:$0xff]
  %v267 = vld [vmem:[%s0 + $0x20] sm:$0x3f]
  %v273 = vcombine.high %v263, %v263
  %v275 = vunpack.c.l.s4 1983009808
  %v276 = vunpack.c.0.s8 %v275
  %v277 = vlaneseq
  %v278 = vshrl.u32 %v277, 7
  %v279 = vsub.s32 %v276, %v278
  %v280 = vrot.slane %v263, %v279
  %v282 = vunpack.c.l.s4 1983009808
  %v283 = vunpack.c.0.s8 %v282
  %v284 = vlaneseq
  %v285 = vshrl.u32 %v284, 7
  %v286 = vsub.s32 %v283, %v285
  %v287 = vrot.slane %v273, %v286
  %v288 = vcombine.high %v264, %v264
  %v290 = vunpack.c.l.s4 1983009808
  %v291 = vunpack.c.0.s8 %v290
  %v292 = vlaneseq
  %v293 = vshrl.u32 %v292, 7
  %v294 = vsub.s32 %v291, %v293
  %v295 = vrot.slane %v264, %v294
  %v297 = vunpack.c.l.s4 1983009808
  %v298 = vunpack.c.0.s8 %v297
  %v299 = vlaneseq
  %v300 = vshrl.u32 %v299, 7
  %v301 = vsub.s32 %v298, %v300
  %v302 = vrot.slane %v288, %v301
  %v303 = vcombine.high %v265, %v265
  %v305 = vunpack.c.l.s4 1983009808
  %v306 = vunpack.c.0.s8 %v305
  %v307 = vlaneseq
  %v308 = vshrl.u32 %v307, 7
  %v309 = vsub.s32 %v306, %v308
  %v310 = vrot.slane %v265, %v309
  %v312 = vunpack.c.l.s4 1983009808
  %v313 = vunpack.c.0.s8 %v312
  %v314 = vlaneseq
  %v315 = vshrl.u32 %v314, 7
  %v316 = vsub.s32 %v313, %v315
  %v317 = vrot.slane %v303, %v316
  %v318 = vcombine.high %v266, %v266
  %v320 = vunpack.c.l.s4 1983009808
  %v321 = vunpack.c.0.s8 %v320
  %v322 = vlaneseq
  %v323 = vshrl.u32 %v322, 7
  %v324 = vsub.s32 %v321, %v323
  %v325 = vrot.slane %v266, %v324
  %v327 = vunpack.c.l.s4 1983009808
  %v328 = vunpack.c.0.s8 %v327
  %v329 = vlaneseq
  %v330 = vshrl.u32 %v329, 7
  %v331 = vsub.s32 %v328, %v330
  %v332 = vrot.slane %v318, %v331
  %v333 = vcombine.high %v267, %v267
  %v335 = vunpack.c.l.s4 1983009808
  %v336 = vunpack.c.0.s8 %v335
  %v337 = vlaneseq
  %v338 = vshrl.u32 %v337, 7
  %v339 = vsub.s32 %v336, %v338
  %v340 = vrot.slane %v267, %v339
  %v342 = vunpack.c.l.s4 1983009808
  %v343 = vunpack.c.0.s8 %v342
  %v344 = vlaneseq
  %v345 = vshrl.u32 %v344, 7
  %v346 = vsub.s32 %v343, %v345
  %v347 = vrot.slane %v333, %v346
  %348 = vrot.lane.b32.xlu0 %v280, 126
  %v349 = vpop.permute.xlu0 %348
  %350 = vrot.lane.b32.xlu0 %v287, 126
  %v351 = vpop.permute.xlu0 %350
  %352 = vrot.lane.b32.xlu0 %v295, 126
  %v353 = vpop.permute.xlu0 %352
  %354 = vrot.lane.b32.xlu0 %v302, 126
  %v355 = vpop.permute.xlu0 %354
  %356 = vrot.lane.b32.xlu0 %v310, 126
  %v357 = vpop.permute.xlu0 %356
  %358 = vrot.lane.b32.xlu0 %v317, 126
  %v359 = vpop.permute.xlu0 %358
  %360 = vrot.lane.b32.xlu0 %v325, 126
  %v361 = vpop.permute.xlu0 %360
  %362 = vrot.lane.b32.xlu0 %v332, 126
  %v363 = vpop.permute.xlu0 %362
  %364 = vrot.lane.b32.xlu0 %v340, 126
  %v365 = vpop.permute.xlu0 %364
  %366 = vrot.lane.b32.xlu0 %v347, 126
  %v367 = vpop.permute.xlu0 %366
  %v368 = vrot.slane %v349, 4
  %v369 = vrot.slane %v351, 4
  %v370 = vrot.slane %v353, 4
  %v371 = vrot.slane %v355, 4
  %v372 = vrot.slane %v357, 4
  %v373 = vrot.slane %v359, 4
  %v374 = vrot.slane %v361, 4
  %v375 = vrot.slane %v363, 4
  %v376 = vrot.slane %v365, 4
  %v377 = vrot.slane %v367, 4
  %v378 = vsel %vm225, %v368, %v369
  %vm379 = vcmask 1031168
  %v380 = vsel %vm379, %v349, %v378
  %v381 = vsel %vm225, %v369, %v370
  %v382 = vsel %vm379, %v351, %v381
  %v383 = vsel %vm225, %v370, %v371
  %v384 = vsel %vm379, %v353, %v383
  %v385 = vsel %vm225, %v371, %v372
  %v386 = vsel %vm379, %v355, %v385
  %v387 = vsel %vm225, %v372, %v373
  %v388 = vsel %vm379, %v357, %v387
  %v389 = vsel %vm225, %v373, %v374
  %v390 = vsel %vm379, %v359, %v389
  %v391 = vsel %vm225, %v374, %v375
  %v392 = vsel %vm379, %v361, %v391
  %v393 = vsel %vm225, %v375, %v376
  %v394 = vsel %vm379, %v363, %v393
  %v395 = vsel %vm225, %v376, %v377
  %v396 = vsel %vm379, %v365, %v395
  %406 = vst [vmem:[#allocation2 + $0x48] sm:$0x33] %v380
  %407 = vst [vmem:[#allocation2 + $0x50] sm:$0x33] %v382
  %408 = vst [vmem:[#allocation2 + $0x58] sm:$0x33] %v384
  %409 = vst [vmem:[#allocation2 + $0x60] sm:$0x33] %v386
  %410 = vst [vmem:[#allocation2 + $0x68] sm:$0x33] %v388
  %411 = vst [vmem:[#allocation2 + $0x70] sm:$0x33] %v390
  %412 = vst [vmem:[#allocation2 + $0x78] sm:$0x33] %v392
  %413 = vst [vmem:[#allocation2 + $0x80] sm:$0x33] %v394
  %414 = vst [vmem:[#allocation2 + $0x88] sm:$0x33] %v396
  %v415 = vld [vmem:[%s0] sm:$0xff]
  %v416 = vld [vmem:[%s0 + $0x8] sm:$0xff]
  %v417 = vld [vmem:[%s0 + $0x10] sm:$0xff]
  %v418 = vld [vmem:[%s0 + $0x18] sm:$0xff]
  %v419 = vld [vmem:[%s0 + $0x20] sm:$0x3f]
  %v425 = vcombine.low %v415, %v415
  %v427 = vunpack.c.l.s4 1983009808
  %v428 = vunpack.c.0.s8 %v427
  %v429 = vlaneseq
  %v430 = vshrl.u32 %v429, 7
  %v431 = vsub.s32 %v428, %v430
  %v432 = vrot.slane %v425, %v431
  %v434 = vunpack.c.l.s4 1983009808
  %v435 = vunpack.c.0.s8 %v434
  %v436 = vlaneseq
  %v437 = vshrl.u32 %v436, 7
  %v438 = vsub.s32 %v435, %v437
  %v439 = vrot.slane %v415, %v438
  %v440 = vcombine.low %v416, %v416
  %v442 = vunpack.c.l.s4 1983009808
  %v443 = vunpack.c.0.s8 %v442
  %v444 = vlaneseq
  %v445 = vshrl.u32 %v444, 7
  %v446 = vsub.s32 %v443, %v445
  %v447 = vrot.slane %v440, %v446
  %v449 = vunpack.c.l.s4 1983009808
  %v450 = vunpack.c.0.s8 %v449
  %v451 = vlaneseq
  %v452 = vshrl.u32 %v451, 7
  %v453 = vsub.s32 %v450, %v452
  %v454 = vrot.slane %v416, %v453
  %v455 = vcombine.low %v417, %v417
  %v457 = vunpack.c.l.s4 1983009808
  %v458 = vunpack.c.0.s8 %v457
  %v459 = vlaneseq
  %v460 = vshrl.u32 %v459, 7
  %v461 = vsub.s32 %v458, %v460
  %v462 = vrot.slane %v455, %v461
  %v464 = vunpack.c.l.s4 1983009808
  %v465 = vunpack.c.0.s8 %v464
  %v466 = vlaneseq
  %v467 = vshrl.u32 %v466, 7
  %v468 = vsub.s32 %v465, %v467
  %v469 = vrot.slane %v417, %v468
  %v470 = vcombine.low %v418, %v418
  %v472 = vunpack.c.l.s4 1983009808
  %v473 = vunpack.c.0.s8 %v472
  %v474 = vlaneseq
  %v475 = vshrl.u32 %v474, 7
  %v476 = vsub.s32 %v473, %v475
  %v477 = vrot.slane %v470, %v476
  %v479 = vunpack.c.l.s4 1983009808
  %v480 = vunpack.c.0.s8 %v479
  %v481 = vlaneseq
  %v482 = vshrl.u32 %v481, 7
  %v483 = vsub.s32 %v480, %v482
  %v484 = vrot.slane %v418, %v483
  %v485 = vcombine.low %v419, %v419
  %v487 = vunpack.c.l.s4 1983009808
  %v488 = vunpack.c.0.s8 %v487
  %v489 = vlaneseq
  %v490 = vshrl.u32 %v489, 7
  %v491 = vsub.s32 %v488, %v490
  %v492 = vrot.slane %v485, %v491
  %v494 = vunpack.c.l.s4 1983009808
  %v495 = vunpack.c.0.s8 %v494
  %v496 = vlaneseq
  %v497 = vshrl.u32 %v496, 7
  %v498 = vsub.s32 %v495, %v497
  %v499 = vrot.slane %v419, %v498
  %500 = vrot.lane.b32.xlu0 %v432, 110
  %v501 = vpop.permute.xlu0 %500
  %502 = vrot.lane.b32.xlu0 %v439, 110
  %v503 = vpop.permute.xlu0 %502
  %504 = vrot.lane.b32.xlu0 %v447, 110
  %v505 = vpop.permute.xlu0 %504
  %506 = vrot.lane.b32.xlu0 %v454, 110
  %v507 = vpop.permute.xlu0 %506
  %508 = vrot.lane.b32.xlu0 %v462, 110
  %v509 = vpop.permute.xlu0 %508
  %510 = vrot.lane.b32.xlu0 %v469, 110
  %v511 = vpop.permute.xlu0 %510
  %512 = vrot.lane.b32.xlu0 %v477, 110
  %v513 = vpop.permute.xlu0 %512
  %514 = vrot.lane.b32.xlu0 %v484, 110
  %v515 = vpop.permute.xlu0 %514
  %516 = vrot.lane.b32.xlu0 %v492, 110
  %v517 = vpop.permute.xlu0 %516
  %518 = vrot.lane.b32.xlu0 %v499, 110
  %v519 = vpop.permute.xlu0 %518
  %v520 = vrot.slane %v501, 4
  %v521 = vrot.slane %v503, 4
  %v522 = vrot.slane %v505, 4
  %v523 = vrot.slane %v507, 4
  %v524 = vrot.slane %v509, 4
  %v525 = vrot.slane %v511, 4
  %v526 = vrot.slane %v513, 4
  %v527 = vrot.slane %v515, 4
  %v528 = vrot.slane %v517, 4
  %v529 = vrot.slane %v519, 4
  %v530 = vsel %vm225, %v520, %v521
  %vm531 = vcmask 900096
  %v532 = vsel %vm531, %v501, %v530
  %v533 = vsel %vm225, %v521, %v522
  %v534 = vsel %vm531, %v503, %v533
  %v535 = vsel %vm225, %v522, %v523
  %v536 = vsel %vm531, %v505, %v535
  %v537 = vsel %vm225, %v523, %v524
  %v538 = vsel %vm531, %v507, %v537
  %v539 = vsel %vm225, %v524, %v525
  %v540 = vsel %vm531, %v509, %v539
  %v541 = vsel %vm225, %v525, %v526
  %v542 = vsel %vm531, %v511, %v541
  %v543 = vsel %vm225, %v526, %v527
  %v544 = vsel %vm531, %v513, %v543
  %v545 = vsel %vm225, %v527, %v528
  %v546 = vsel %vm531, %v515, %v545
  %v547 = vsel %vm225, %v528, %v529
  %v548 = vsel %vm531, %v517, %v547
  %558 = vst [vmem:[#allocation2 + $0x48] sm:$0xcc] %v532
  %559 = vst [vmem:[#allocation2 + $0x50] sm:$0xcc] %v534
  %560 = vst [vmem:[#allocation2 + $0x58] sm:$0xcc] %v536
  %561 = vst [vmem:[#allocation2 + $0x60] sm:$0xcc] %v538
  %562 = vst [vmem:[#allocation2 + $0x68] sm:$0xcc] %v540
  %563 = vst [vmem:[#allocation2 + $0x70] sm:$0xcc] %v542
  %564 = vst [vmem:[#allocation2 + $0x78] sm:$0xcc] %v544
  %565 = vst [vmem:[#allocation2 + $0x80] sm:$0xcc] %v546
  %566 = vst [vmem:[#allocation2 + $0x88] sm:$0xcc] %v548
  %v567 = vld [vmem:[%s0] sm:$0xff]
  %v568 = vld [vmem:[%s0 + $0x8] sm:$0xff]
  %v569 = vld [vmem:[%s0 + $0x10] sm:$0xff]
  %v570 = vld [vmem:[%s0 + $0x18] sm:$0xff]
  %v571 = vld [vmem:[%s0 + $0x20] sm:$0x3f]
  %v577 = vcombine.high %v567, %v567
  %v579 = vunpack.c.l.s4 1983009808
  %v580 = vunpack.c.0.s8 %v579
  %v581 = vlaneseq
  %v582 = vshrl.u32 %v581, 7
  %v583 = vsub.s32 %v580, %v582
  %v584 = vrot.slane %v567, %v583
  %v586 = vunpack.c.l.s4 1983009808
  %v587 = vunpack.c.0.s8 %v586
  %v588 = vlaneseq
  %v589 = vshrl.u32 %v588, 7
  %v590 = vsub.s32 %v587, %v589
  %v591 = vrot.slane %v577, %v590
  %v592 = vcombine.high %v568, %v568
  %v594 = vunpack.c.l.s4 1983009808
  %v595 = vunpack.c.0.s8 %v594
  %v596 = vlaneseq
  %v597 = vshrl.u32 %v596, 7
  %v598 = vsub.s32 %v595, %v597
  %v599 = vrot.slane %v568, %v598
  %v601 = vunpack.c.l.s4 1983009808
  %v602 = vunpack.c.0.s8 %v601
  %v603 = vlaneseq
  %v604 = vshrl.u32 %v603, 7
  %v605 = vsub.s32 %v602, %v604
  %v606 = vrot.slane %v592, %v605
  %v607 = vcombine.high %v569, %v569
  %v609 = vunpack.c.l.s4 1983009808
  %v610 = vunpack.c.0.s8 %v609
  %v611 = vlaneseq
  %v612 = vshrl.u32 %v611, 7
  %v613 = vsub.s32 %v610, %v612
  %v614 = vrot.slane %v569, %v613
  %v616 = vunpack.c.l.s4 1983009808
  %v617 = vunpack.c.0.s8 %v616
  %v618 = vlaneseq
  %v619 = vshrl.u32 %v618, 7
  %v620 = vsub.s32 %v617, %v619
  %v621 = vrot.slane %v607, %v620
  %v622 = vcombine.high %v570, %v570
  %v624 = vunpack.c.l.s4 1983009808
  %v625 = vunpack.c.0.s8 %v624
  %v626 = vlaneseq
  %v627 = vshrl.u32 %v626, 7
  %v628 = vsub.s32 %v625, %v627
  %v629 = vrot.slane %v570, %v628
  %v631 = vunpack.c.l.s4 1983009808
  %v632 = vunpack.c.0.s8 %v631
  %v633 = vlaneseq
  %v634 = vshrl.u32 %v633, 7
  %v635 = vsub.s32 %v632, %v634
  %v636 = vrot.slane %v622, %v635
  %v637 = vcombine.high %v571, %v571
  %v639 = vunpack.c.l.s4 1983009808
  %v640 = vunpack.c.0.s8 %v639
  %v641 = vlaneseq
  %v642 = vshrl.u32 %v641, 7
  %v643 = vsub.s32 %v640, %v642
  %v644 = vrot.slane %v571, %v643
  %v646 = vunpack.c.l.s4 1983009808
  %v647 = vunpack.c.0.s8 %v646
  %v648 = vlaneseq
  %v649 = vshrl.u32 %v648, 7
  %v650 = vsub.s32 %v647, %v649
  %v651 = vrot.slane %v637, %v650
  %652 = vrot.lane.b32.xlu0 %v584, 109
  %v653 = vpop.permute.xlu0 %652
  %654 = vrot.lane.b32.xlu0 %v591, 109
  %v655 = vpop.permute.xlu0 %654
  %656 = vrot.lane.b32.xlu0 %v599, 109
  %v657 = vpop.permute.xlu0 %656
  %658 = vrot.lane.b32.xlu0 %v606, 109
  %v659 = vpop.permute.xlu0 %658
  %660 = vrot.lane.b32.xlu0 %v614, 109
  %v661 = vpop.permute.xlu0 %660
  %662 = vrot.lane.b32.xlu0 %v621, 109
  %v663 = vpop.permute.xlu0 %662
  %664 = vrot.lane.b32.xlu0 %v629, 109
  %v665 = vpop.permute.xlu0 %664
  %666 = vrot.lane.b32.xlu0 %v636, 109
  %v667 = vpop.permute.xlu0 %666
  %668 = vrot.lane.b32.xlu0 %v644, 109
  %v669 = vpop.permute.xlu0 %668
  %670 = vrot.lane.b32.xlu0 %v651, 109
  %v671 = vpop.permute.xlu0 %670
  %v672 = vrot.slane %v653, 4
  %v673 = vrot.slane %v655, 4
  %v674 = vrot.slane %v657, 4
  %v675 = vrot.slane %v659, 4
  %v676 = vrot.slane %v661, 4
  %v677 = vrot.slane %v663, 4
  %v678 = vrot.slane %v665, 4
  %v679 = vrot.slane %v667, 4
  %v680 = vrot.slane %v669, 4
  %v681 = vrot.slane %v671, 4
  %v682 = vsel %vm225, %v672, %v673
  %vm683 = vcmask 891904
  %v684 = vsel %vm683, %v653, %v682
  %v685 = vsel %vm225, %v673, %v674
  %v686 = vsel %vm683, %v655, %v685
  %v687 = vsel %vm225, %v674, %v675
  %v688 = vsel %vm683, %v657, %v687
  %v689 = vsel %vm225, %v675, %v676
  %v690 = vsel %vm683, %v659, %v689
  %v691 = vsel %vm225, %v676, %v677
  %v692 = vsel %vm683, %v661, %v691
  %v693 = vsel %vm225, %v677, %v678
  %v694 = vsel %vm683, %v663, %v693
  %v695 = vsel %vm225, %v678, %v679
  %v696 = vsel %vm683, %v665, %v695
  %v697 = vsel %vm225, %v679, %v680
  %v698 = vsel %vm683, %v667, %v697
  %v699 = vsel %vm225, %v680, %v681
  %v700 = vsel %vm683, %v669, %v699
  %710 = vst [vmem:[#allocation2 + $0x90] sm:$0x33] %v684
  %711 = vst [vmem:[#allocation2 + $0x98] sm:$0x33] %v686
  %712 = vst [vmem:[#allocation2 + $0xa0] sm:$0x33] %v688
  %713 = vst [vmem:[#allocation2 + $0xa8] sm:$0x33] %v690
  %714 = vst [vmem:[#allocation2 + $0xb0] sm:$0x33] %v692
  %715 = vst [vmem:[#allocation2 + $0xb8] sm:$0x33] %v694
  %716 = vst [vmem:[#allocation2 + $0xc0] sm:$0x33] %v696
  %717 = vst [vmem:[#allocation2 + $0xc8] sm:$0x33] %v698
  %718 = vst [vmem:[#allocation2 + $0xd0] sm:$0x33] %v700
  %v719 = vld [vmem:[%s0] sm:$0xff]
  %v720 = vld [vmem:[%s0 + $0x8] sm:$0xff]
  %v721 = vld [vmem:[%s0 + $0x10] sm:$0xff]
  %v722 = vld [vmem:[%s0 + $0x18] sm:$0xff]
  %v723 = vld [vmem:[%s0 + $0x20] sm:$0x3f]
  %v729 = vcombine.low %v719, %v719
  %v731 = vunpack.c.l.s4 1983009808
  %v732 = vunpack.c.0.s8 %v731
  %v733 = vlaneseq
  %v734 = vshrl.u32 %v733, 7
  %v735 = vsub.s32 %v732, %v734
  %v736 = vrot.slane %v729, %v735
  %v738 = vunpack.c.l.s4 1983009808
  %v739 = vunpack.c.0.s8 %v738
  %v740 = vlaneseq
  %v741 = vshrl.u32 %v740, 7
  %v742 = vsub.s32 %v739, %v741
  %v743 = vrot.slane %v719, %v742
  %v744 = vcombine.low %v720, %v720
  %v746 = vunpack.c.l.s4 1983009808
  %v747 = vunpack.c.0.s8 %v746
  %v748 = vlaneseq
  %v749 = vshrl.u32 %v748, 7
  %v750 = vsub.s32 %v747, %v749
  %v751 = vrot.slane %v744, %v750
  %v753 = vunpack.c.l.s4 1983009808
  %v754 = vunpack.c.0.s8 %v753
  %v755 = vlaneseq
  %v756 = vshrl.u32 %v755, 7
  %v757 = vsub.s32 %v754, %v756
  %v758 = vrot.slane %v720, %v757
  %v759 = vcombine.low %v721, %v721
  %v761 = vunpack.c.l.s4 1983009808
  %v762 = vunpack.c.0.s8 %v761
  %v763 = vlaneseq
  %v764 = vshrl.u32 %v763, 7
  %v765 = vsub.s32 %v762, %v764
  %v766 = vrot.slane %v759, %v765
  %v768 = vunpack.c.l.s4 1983009808
  %v769 = vunpack.c.0.s8 %v768
  %v770 = vlaneseq
  %v771 = vshrl.u32 %v770, 7
  %v772 = vsub.s32 %v769, %v771
  %v773 = vrot.slane %v721, %v772
  %v774 = vcombine.low %v722, %v722
  %v776 = vunpack.c.l.s4 1983009808
  %v777 = vunpack.c.0.s8 %v776
  %v778 = vlaneseq
  %v779 = vshrl.u32 %v778, 7
  %v780 = vsub.s32 %v777, %v779
  %v781 = vrot.slane %v774, %v780
  %v783 = vunpack.c.l.s4 1983009808
  %v784 = vunpack.c.0.s8 %v783
  %v785 = vlaneseq
  %v786 = vshrl.u32 %v785, 7
  %v787 = vsub.s32 %v784, %v786
  %v788 = vrot.slane %v722, %v787
  %v789 = vcombine.low %v723, %v723
  %v791 = vunpack.c.l.s4 1983009808
  %v792 = vunpack.c.0.s8 %v791
  %v793 = vlaneseq
  %v794 = vshrl.u32 %v793, 7
  %v795 = vsub.s32 %v792, %v794
  %v796 = vrot.slane %v789, %v795
  %v798 = vunpack.c.l.s4 1983009808
  %v799 = vunpack.c.0.s8 %v798
  %v800 = vlaneseq
  %v801 = vshrl.u32 %v800, 7
  %v802 = vsub.s32 %v799, %v801
  %v803 = vrot.slane %v723, %v802
  %804 = vrot.lane.b32.xlu0 %v736, 108
  %v805 = vpop.permute.xlu0 %804
  %806 = vrot.lane.b32.xlu0 %v743, 108
  %v807 = vpop.permute.xlu0 %806
  %808 = vrot.lane.b32.xlu0 %v751, 108
  %v809 = vpop.permute.xlu0 %808
  %810 = vrot.lane.b32.xlu0 %v758, 108
  %v811 = vpop.permute.xlu0 %810
  %812 = vrot.lane.b32.xlu0 %v766, 108
  %v813 = vpop.permute.xlu0 %812
  %814 = vrot.lane.b32.xlu0 %v773, 108
  %v815 = vpop.permute.xlu0 %814
  %816 = vrot.lane.b32.xlu0 %v781, 108
  %v817 = vpop.permute.xlu0 %816
  %818 = vrot.lane.b32.xlu0 %v788, 108
  %v819 = vpop.permute.xlu0 %818
  %820 = vrot.lane.b32.xlu0 %v796, 108
  %v821 = vpop.permute.xlu0 %820
  %822 = vrot.lane.b32.xlu0 %v803, 108
  %v823 = vpop.permute.xlu0 %822
  %v824 = vrot.slane %v805, 4
  %v825 = vrot.slane %v807, 4
  %v826 = vrot.slane %v809, 4
  %v827 = vrot.slane %v811, 4
  %v828 = vrot.slane %v813, 4
  %v829 = vrot.slane %v815, 4
  %v830 = vrot.slane %v817, 4
  %v831 = vrot.slane %v819, 4
  %v832 = vrot.slane %v821, 4
  %v833 = vrot.slane %v823, 4
  %v834 = vsel %vm225, %v824, %v825
  %vm835 = vcmask 883712
  %v836 = vsel %vm835, %v805, %v834
  %v837 = vsel %vm225, %v825, %v826
  %v838 = vsel %vm835, %v807, %v837
  %v839 = vsel %vm225, %v826, %v827
  %v840 = vsel %vm835, %v809, %v839
  %v841 = vsel %vm225, %v827, %v828
  %v842 = vsel %vm835, %v811, %v841
  %v843 = vsel %vm225, %v828, %v829
  %v844 = vsel %vm835, %v813, %v843
  %v845 = vsel %vm225, %v829, %v830
  %v846 = vsel %vm835, %v815, %v845
  %v847 = vsel %vm225, %v830, %v831
  %v848 = vsel %vm835, %v817, %v847
  %v849 = vsel %vm225, %v831, %v832
  %v850 = vsel %vm835, %v819, %v849
  %v851 = vsel %vm225, %v832, %v833
  %v852 = vsel %vm835, %v821, %v851
  %862 = vst [vmem:[#allocation2 + $0x90] sm:$0xcc] %v836
  %863 = vst [vmem:[#allocation2 + $0x98] sm:$0xcc] %v838
  %864 = vst [vmem:[#allocation2 + $0xa0] sm:$0xcc] %v840
  %865 = vst [vmem:[#allocation2 + $0xa8] sm:$0xcc] %v842
  %866 = vst [vmem:[#allocation2 + $0xb0] sm:$0xcc] %v844
  %867 = vst [vmem:[#allocation2 + $0xb8] sm:$0xcc] %v846
  %868 = vst [vmem:[#allocation2 + $0xc0] sm:$0xcc] %v848
  %869 = vst [vmem:[#allocation2 + $0xc8] sm:$0xcc] %v850
  %870 = vst [vmem:[#allocation2 + $0xd0] sm:$0xcc] %v852
  %v871 = vld [vmem:[%s0] sm:$0xff]
  %v872 = vld [vmem:[%s0 + $0x8] sm:$0xff]
  %v873 = vld [vmem:[%s0 + $0x10] sm:$0xff]
  %v874 = vld [vmem:[%s0 + $0x18] sm:$0xff]
  %v875 = vld [vmem:[%s0 + $0x20] sm:$0x3f]
  %v881 = vcombine.high %v871, %v871
  %v883 = vunpack.c.l.s4 1983009808
  %v884 = vunpack.c.0.s8 %v883
  %v885 = vlaneseq
  %v886 = vshrl.u32 %v885, 7
  %v887 = vsub.s32 %v884, %v886
  %v888 = vrot.slane %v871, %v887
  %v890 = vunpack.c.l.s4 1983009808
  %v891 = vunpack.c.0.s8 %v890
  %v892 = vlaneseq
  %v893 = vshrl.u32 %v892, 7
  %v894 = vsub.s32 %v891, %v893
  %v895 = vrot.slane %v881, %v894
  %v896 = vcombine.high %v872, %v872
  %v898 = vunpack.c.l.s4 1983009808
  %v899 = vunpack.c.0.s8 %v898
  %v900 = vlaneseq
  %v901 = vshrl.u32 %v900, 7
  %v902 = vsub.s32 %v899, %v901
  %v903 = vrot.slane %v872, %v902
  %v905 = vunpack.c.l.s4 1983009808
  %v906 = vunpack.c.0.s8 %v905
  %v907 = vlaneseq
  %v908 = vshrl.u32 %v907, 7
  %v909 = vsub.s32 %v906, %v908
  %v910 = vrot.slane %v896, %v909
  %v911 = vcombine.high %v873, %v873
  %v913 = vunpack.c.l.s4 1983009808
  %v914 = vunpack.c.0.s8 %v913
  %v915 = vlaneseq
  %v916 = vshrl.u32 %v915, 7
  %v917 = vsub.s32 %v914, %v916
  %v918 = vrot.slane %v873, %v917
  %v920 = vunpack.c.l.s4 1983009808
  %v921 = vunpack.c.0.s8 %v920
  %v922 = vlaneseq
  %v923 = vshrl.u32 %v922, 7
  %v924 = vsub.s32 %v921, %v923
  %v925 = vrot.slane %v911, %v924
  %v926 = vcombine.high %v874, %v874
  %v928 = vunpack.c.l.s4 1983009808
  %v929 = vunpack.c.0.s8 %v928
  %v930 = vlaneseq
  %v931 = vshrl.u32 %v930, 7
  %v932 = vsub.s32 %v929, %v931
  %v933 = vrot.slane %v874, %v932
  %v935 = vunpack.c.l.s4 1983009808
  %v936 = vunpack.c.0.s8 %v935
  %v937 = vlaneseq
  %v938 = vshrl.u32 %v937, 7
  %v939 = vsub.s32 %v936, %v938
  %v940 = vrot.slane %v926, %v939
  %v941 = vcombine.high %v875, %v875
  %v943 = vunpack.c.l.s4 1983009808
  %v944 = vunpack.c.0.s8 %v943
  %v945 = vlaneseq
  %v946 = vshrl.u32 %v945, 7
  %v947 = vsub.s32 %v944, %v946
  %v948 = vrot.slane %v875, %v947
  %v950 = vunpack.c.l.s4 1983009808
  %v951 = vunpack.c.0.s8 %v950
  %v952 = vlaneseq
  %v953 = vshrl.u32 %v952, 7
  %v954 = vsub.s32 %v951, %v953
  %v955 = vrot.slane %v941, %v954
  %956 = vrot.lane.b32.xlu0 %v888, 92
  %v957 = vpop.permute.xlu0 %956
  %958 = vrot.lane.b32.xlu0 %v895, 92
  %v959 = vpop.permute.xlu0 %958
  %960 = vrot.lane.b32.xlu0 %v903, 92
  %v961 = vpop.permute.xlu0 %960
  %962 = vrot.lane.b32.xlu0 %v910, 92
  %v963 = vpop.permute.xlu0 %962
  %964 = vrot.lane.b32.xlu0 %v918, 92
  %v965 = vpop.permute.xlu0 %964
  %966 = vrot.lane.b32.xlu0 %v925, 92
  %v967 = vpop.permute.xlu0 %966
  %968 = vrot.lane.b32.xlu0 %v933, 92
  %v969 = vpop.permute.xlu0 %968
  %970 = vrot.lane.b32.xlu0 %v940, 92
  %v971 = vpop.permute.xlu0 %970
  %972 = vrot.lane.b32.xlu0 %v948, 92
  %v973 = vpop.permute.xlu0 %972
  %974 = vrot.lane.b32.xlu0 %v955, 92
  %v975 = vpop.permute.xlu0 %974
  %v976 = vrot.slane %v957, 4
  %v977 = vrot.slane %v959, 4
  %v978 = vrot.slane %v961, 4
  %v979 = vrot.slane %v963, 4
  %v980 = vrot.slane %v965, 4
  %v981 = vrot.slane %v967, 4
  %v982 = vrot.slane %v969, 4
  %v983 = vrot.slane %v971, 4
  %v984 = vrot.slane %v973, 4
  %v985 = vrot.slane %v975, 4
  %v986 = vsel %vm225, %v976, %v977
  %vm987 = vcmask 752640
  %v988 = vsel %vm987, %v957, %v986
  %v989 = vsel %vm225, %v977, %v978
  %v990 = vsel %vm987, %v959, %v989
  %v991 = vsel %vm225, %v978, %v979
  %v992 = vsel %vm987, %v961, %v991
  %v993 = vsel %vm225, %v979, %v980
  %v994 = vsel %vm987, %v963, %v993
  %v995 = vsel %vm225, %v980, %v981
  %v996 = vsel %vm987, %v965, %v995
  %v997 = vsel %vm225, %v981, %v982
  %v998 = vsel %vm987, %v967, %v997
  %v999 = vsel %vm225, %v982, %v983
  %v1000 = vsel %vm987, %v969, %v999
  %v1001 = vsel %vm225, %v983, %v984
  %v1002 = vsel %vm987, %v971, %v1001
  %v1003 = vsel %vm225, %v984, %v985
  %v1004 = vsel %vm987, %v973, %v1003
  %1014 = vst [vmem:[#allocation2 + $0xd8] sm:$0x33] %v988
  %1015 = vst [vmem:[#allocation2 + $0xe0] sm:$0x33] %v990
  %1016 = vst [vmem:[#allocation2 + $0xe8] sm:$0x33] %v992
  %1017 = vst [vmem:[#allocation2 + $0xf0] sm:$0x33] %v994
  %1018 = vst [vmem:[#allocation2 + $0xf8] sm:$0x33] %v996
  %1019 = vst [vmem:[#allocation2 + $0x100] sm:$0x33] %v998
  %1020 = vst [vmem:[#allocation2 + $0x108] sm:$0x33] %v1000
  %1021 = vst [vmem:[#allocation2 + $0x110] sm:$0x33] %v1002
  %1022 = vst [vmem:[#allocation2 + $0x118] sm:$0x33] %v1004
  %v1023 = vld [vmem:[%s0] sm:$0xff]
  %v1024 = vld [vmem:[%s0 + $0x8] sm:$0xff]
  %v1025 = vld [vmem:[%s0 + $0x10] sm:$0xff]
  %v1026 = vld [vmem:[%s0 + $0x18] sm:$0xff]
  %v1027 = vld [vmem:[%s0 + $0x20] sm:$0x3f]
  %v1033 = vcombine.low %v1023, %v1023
  %v1035 = vunpack.c.l.s4 1983009808
  %v1036 = vunpack.c.0.s8 %v1035
  %v1037 = vlaneseq
  %v1038 = vshrl.u32 %v1037, 7
  %v1039 = vsub.s32 %v1036, %v1038
  %v1040 = vrot.slane %v1033, %v1039
  %v1042 = vunpack.c.l.s4 1983009808
  %v1043 = vunpack.c.0.s8 %v1042
  %v1044 = vlaneseq
  %v1045 = vshrl.u32 %v1044, 7
  %v1046 = vsub.s32 %v1043, %v1045
  %v1047 = vrot.slane %v1023, %v1046
  %v1048 = vcombine.low %v1024, %v1024
  %v1050 = vunpack.c.l.s4 1983009808
  %v1051 = vunpack.c.0.s8 %v1050
  %v1052 = vlaneseq
  %v1053 = vshrl.u32 %v1052, 7
  %v1054 = vsub.s32 %v1051, %v1053
  %v1055 = vrot.slane %v1048, %v1054
  %v1057 = vunpack.c.l.s4 1983009808
  %v1058 = vunpack.c.0.s8 %v1057
  %v1059 = vlaneseq
  %v1060 = vshrl.u32 %v1059, 7
  %v1061 = vsub.s32 %v1058, %v1060
  %v1062 = vrot.slane %v1024, %v1061
  %v1063 = vcombine.low %v1025, %v1025
  %v1065 = vunpack.c.l.s4 1983009808
  %v1066 = vunpack.c.0.s8 %v1065
  %v1067 = vlaneseq
  %v1068 = vshrl.u32 %v1067, 7
  %v1069 = vsub.s32 %v1066, %v1068
  %v1070 = vrot.slane %v1063, %v1069
  %v1072 = vunpack.c.l.s4 1983009808
  %v1073 = vunpack.c.0.s8 %v1072
  %v1074 = vlaneseq
  %v1075 = vshrl.u32 %v1074, 7
  %v1076 = vsub.s32 %v1073, %v1075
  %v1077 = vrot.slane %v1025, %v1076
  %v1078 = vcombine.low %v1026, %v1026
  %v1080 = vunpack.c.l.s4 1983009808
  %v1081 = vunpack.c.0.s8 %v1080
  %v1082 = vlaneseq
  %v1083 = vshrl.u32 %v1082, 7
  %v1084 = vsub.s32 %v1081, %v1083
  %v1085 = vrot.slane %v1078, %v1084
  %v1087 = vunpack.c.l.s4 1983009808
  %v1088 = vunpack.c.0.s8 %v1087
  %v1089 = vlaneseq
  %v1090 = vshrl.u32 %v1089, 7
  %v1091 = vsub.s32 %v1088, %v1090
  %v1092 = vrot.slane %v1026, %v1091
  %v1093 = vcombine.low %v1027, %v1027
  %v1095 = vunpack.c.l.s4 1983009808
  %v1096 = vunpack.c.0.s8 %v1095
  %v1097 = vlaneseq
  %v1098 = vshrl.u32 %v1097, 7
  %v1099 = vsub.s32 %v1096, %v1098
  %v1100 = vrot.slane %v1093, %v1099
  %v1102 = vunpack.c.l.s4 1983009808
  %v1103 = vunpack.c.0.s8 %v1102
  %v1104 = vlaneseq
  %v1105 = vshrl.u32 %v1104, 7
  %v1106 = vsub.s32 %v1103, %v1105
  %v1107 = vrot.slane %v1027, %v1106
  %1108 = vrot.lane.b32.xlu0 %v1040, 91
  %v1109 = vpop.permute.xlu0 %1108
  %1110 = vrot.lane.b32.xlu0 %v1047, 91
  %v1111 = vpop.permute.xlu0 %1110
  %1112 = vrot.lane.b32.xlu0 %v1055, 91
  %v1113 = vpop.permute.xlu0 %1112
  %1114 = vrot.lane.b32.xlu0 %v1062, 91
  %v1115 = vpop.permute.xlu0 %1114
  %1116 = vrot.lane.b32.xlu0 %v1070, 91
  %v1117 = vpop.permute.xlu0 %1116
  %1118 = vrot.lane.b32.xlu0 %v1077, 91
  %v1119 = vpop.permute.xlu0 %1118
  %1120 = vrot.lane.b32.xlu0 %v1085, 91
  %v1121 = vpop.permute.xlu0 %1120
  %1122 = vrot.lane.b32.xlu0 %v1092, 91
  %v1123 = vpop.permute.xlu0 %1122
  %1124 = vrot.lane.b32.xlu0 %v1100, 91
  %v1125 = vpop.permute.xlu0 %1124
  %1126 = vrot.lane.b32.xlu0 %v1107, 91
  %v1127 = vpop.permute.xlu0 %1126
  %v1128 = vrot.slane %v1109, 4
  %v1129 = vrot.slane %v1111, 4
  %v1130 = vrot.slane %v1113, 4
  %v1131 = vrot.slane %v1115, 4
  %v1132 = vrot.slane %v1117, 4
  %v1133 = vrot.slane %v1119, 4
  %v1134 = vrot.slane %v1121, 4
  %v1135 = vrot.slane %v1123, 4
  %v1136 = vrot.slane %v1125, 4
  %v1137 = vrot.slane %v1127, 4
  %v1138 = vsel %vm225, %v1128, %v1129
  %vm1139 = vcmask 744448
  %v1140 = vsel %vm1139, %v1109, %v1138
  %v1141 = vsel %vm225, %v1129, %v1130
  %v1142 = vsel %vm1139, %v1111, %v1141
  %v1143 = vsel %vm225, %v1130, %v1131
  %v1144 = vsel %vm1139, %v1113, %v1143
  %v1145 = vsel %vm225, %v1131, %v1132
  %v1146 = vsel %vm1139, %v1115, %v1145
  %v1147 = vsel %vm225, %v1132, %v1133
  %v1148 = vsel %vm1139, %v1117, %v1147
  %v1149 = vsel %vm225, %v1133, %v1134
  %v1150 = vsel %vm1139, %v1119, %v1149
  %v1151 = vsel %vm225, %v1134, %v1135
  %v1152 = vsel %vm1139, %v1121, %v1151
  %v1153 = vsel %vm225, %v1135, %v1136
  %v1154 = vsel %vm1139, %v1123, %v1153
  %v1155 = vsel %vm225, %v1136, %v1137
  %v1156 = vsel %vm1139, %v1125, %v1155
  %1166 = vst [vmem:[#allocation2 + $0xd8] sm:$0xcc] %v1140
  %1167 = vst [vmem:[#allocation2 + $0xe0] sm:$0xcc] %v1142
  %1168 = vst [vmem:[#allocation2 + $0xe8] sm:$0xcc] %v1144
  %1169 = vst [vmem:[#allocation2 + $0xf0] sm:$0xcc] %v1146
  %1170 = vst [vmem:[#allocation2 + $0xf8] sm:$0xcc] %v1148
  %1171 = vst [vmem:[#allocation2 + $0x100] sm:$0xcc] %v1150
  %1172 = vst [vmem:[#allocation2 + $0x108] sm:$0xcc] %v1152
  %1173 = vst [vmem:[#allocation2 + $0x110] sm:$0xcc] %v1154
  %1174 = vst [vmem:[#allocation2 + $0x118] sm:$0xcc] %v1156
  %v1175 = vld [vmem:[%s0] sm:$0xff]
  %v1176 = vld [vmem:[%s0 + $0x8] sm:$0xff]
  %v1177 = vld [vmem:[%s0 + $0x10] sm:$0xff]
  %v1178 = vld [vmem:[%s0 + $0x18] sm:$0xff]
  %v1179 = vld [vmem:[%s0 + $0x20] sm:$0x3f]
  %v1185 = vcombine.high %v1175, %v1175
  %v1187 = vunpack.c.l.s4 1983009808
  %v1188 = vunpack.c.0.s8 %v1187
  %v1189 = vlaneseq
  %v1190 = vshrl.u32 %v1189, 7
  %v1191 = vsub.s32 %v1188, %v1190
  %v1192 = vrot.slane %v1175, %v1191
  %v1194 = vunpack.c.l.s4 1983009808
  %v1195 = vunpack.c.0.s8 %v1194
  %v1196 = vlaneseq
  %v1197 = vshrl.u32 %v1196, 7
  %v1198 = vsub.s32 %v1195, %v1197
  %v1199 = vrot.slane %v1185, %v1198
  %v1200 = vcombine.high %v1176, %v1176
  %v1202 = vunpack.c.l.s4 1983009808
  %v1203 = vunpack.c.0.s8 %v1202
  %v1204 = vlaneseq
  %v1205 = vshrl.u32 %v1204, 7
  %v1206 = vsub.s32 %v1203, %v1205
  %v1207 = vrot.slane %v1176, %v1206
  %v1209 = vunpack.c.l.s4 1983009808
  %v1210 = vunpack.c.0.s8 %v1209
  %v1211 = vlaneseq
  %v1212 = vshrl.u32 %v1211, 7
  %v1213 = vsub.s32 %v1210, %v1212
  %v1214 = vrot.slane %v1200, %v1213
  %v1215 = vcombine.high %v1177, %v1177
  %v1217 = vunpack.c.l.s4 1983009808
  %v1218 = vunpack.c.0.s8 %v1217
  %v1219 = vlaneseq
  %v1220 = vshrl.u32 %v1219, 7
  %v1221 = vsub.s32 %v1218, %v1220
  %v1222 = vrot.slane %v1177, %v1221
  %v1224 = vunpack.c.l.s4 1983009808
  %v1225 = vunpack.c.0.s8 %v1224
  %v1226 = vlaneseq
  %v1227 = vshrl.u32 %v1226, 7
  %v1228 = vsub.s32 %v1225, %v1227
  %v1229 = vrot.slane %v1215, %v1228
  %v1230 = vcombine.high %v1178, %v1178
  %v1232 = vunpack.c.l.s4 1983009808
  %v1233 = vunpack.c.0.s8 %v1232
  %v1234 = vlaneseq
  %v1235 = vshrl.u32 %v1234, 7
  %v1236 = vsub.s32 %v1233, %v1235
  %v1237 = vrot.slane %v1178, %v1236
  %v1239 = vunpack.c.l.s4 1983009808
  %v1240 = vunpack.c.0.s8 %v1239
  %v1241 = vlaneseq
  %v1242 = vshrl.u32 %v1241, 7
  %v1243 = vsub.s32 %v1240, %v1242
  %v1244 = vrot.slane %v1230, %v1243
  %v1245 = vcombine.high %v1179, %v1179
  %v1247 = vunpack.c.l.s4 1983009808
  %v1248 = vunpack.c.0.s8 %v1247
  %v1249 = vlaneseq
  %v1250 = vshrl.u32 %v1249, 7
  %v1251 = vsub.s32 %v1248, %v1250
  %v1252 = vrot.slane %v1179, %v1251
  %v1254 = vunpack.c.l.s4 1983009808
  %v1255 = vunpack.c.0.s8 %v1254
  %v1256 = vlaneseq
  %v1257 = vshrl.u32 %v1256, 7
  %v1258 = vsub.s32 %v1255, %v1257
  %v1259 = vrot.slane %v1245, %v1258
  %1260 = vrot.lane.b32.xlu0 %v1192, 90
  %v1261 = vpop.permute.xlu0 %1260
  %1262 = vrot.lane.b32.xlu0 %v1199, 90
  %v1263 = vpop.permute.xlu0 %1262
  %1264 = vrot.lane.b32.xlu0 %v1207, 90
  %v1265 = vpop.permute.xlu0 %1264
  %1266 = vrot.lane.b32.xlu0 %v1214, 90
  %v1267 = vpop.permute.xlu0 %1266
  %1268 = vrot.lane.b32.xlu0 %v1222, 90
  %v1269 = vpop.permute.xlu0 %1268
  %1270 = vrot.lane.b32.xlu0 %v1229, 90
  %v1271 = vpop.permute.xlu0 %1270
  %1272 = vrot.lane.b32.xlu0 %v1237, 90
  %v1273 = vpop.permute.xlu0 %1272
  %1274 = vrot.lane.b32.xlu0 %v1244, 90
  %v1275 = vpop.permute.xlu0 %1274
  %1276 = vrot.lane.b32.xlu0 %v1252, 90
  %v1277 = vpop.permute.xlu0 %1276
  %1278 = vrot.lane.b32.xlu0 %v1259, 90
  %v1279 = vpop.permute.xlu0 %1278
  %v1280 = vrot.slane %v1261, 4
  %v1281 = vrot.slane %v1263, 4
  %v1282 = vrot.slane %v1265, 4
  %v1283 = vrot.slane %v1267, 4
  %v1284 = vrot.slane %v1269, 4
  %v1285 = vrot.slane %v1271, 4
  %v1286 = vrot.slane %v1273, 4
  %v1287 = vrot.slane %v1275, 4
  %v1288 = vrot.slane %v1277, 4
  %v1289 = vrot.slane %v1279, 4
  %v1290 = vsel %vm225, %v1280, %v1281
  %vm1291 = vcmask 736256
  %v1292 = vsel %vm1291, %v1261, %v1290
  %v1293 = vsel %vm225, %v1281, %v1282
  %v1294 = vsel %vm1291, %v1263, %v1293
  %v1295 = vsel %vm225, %v1282, %v1283
  %v1296 = vsel %vm1291, %v1265, %v1295
  %v1297 = vsel %vm225, %v1283, %v1284
  %v1298 = vsel %vm1291, %v1267, %v1297
  %v1299 = vsel %vm225, %v1284, %v1285
  %v1300 = vsel %vm1291, %v1269, %v1299
  %v1301 = vsel %vm225, %v1285, %v1286
  %v1302 = vsel %vm1291, %v1271, %v1301
  %v1303 = vsel %vm225, %v1286, %v1287
  %v1304 = vsel %vm1291, %v1273, %v1303
  %v1305 = vsel %vm225, %v1287, %v1288
  %v1306 = vsel %vm1291, %v1275, %v1305
  %v1307 = vsel %vm225, %v1288, %v1289
  %v1308 = vsel %vm1291, %v1277, %v1307
  %1318 = vst [vmem:[#allocation2 + $0x120] sm:$0x33] %v1292
  %1319 = vst [vmem:[#allocation2 + $0x128] sm:$0x33] %v1294
  %1320 = vst [vmem:[#allocation2 + $0x130] sm:$0x33] %v1296
  %1321 = vst [vmem:[#allocation2 + $0x138] sm:$0x33] %v1298
  %1322 = vst [vmem:[#allocation2 + $0x140] sm:$0x33] %v1300
  %1323 = vst [vmem:[#allocation2 + $0x148] sm:$0x33] %v1302
  %1324 = vst [vmem:[#allocation2 + $0x150] sm:$0x33] %v1304
  %1325 = vst [vmem:[#allocation2 + $0x158] sm:$0x33] %v1306
  %1326 = vst [vmem:[#allocation2 + $0x160] sm:$0x33] %v1308
  %v1327 = vld [vmem:[%s1] sm:$0xf]
  %v1328 = vld [vmem:[#allocation2] sm:$0xff]
  %v1329 = vld [vmem:[#allocation2 + $0x8] sm:$0xff]
  %v1330 = vld [vmem:[#allocation2 + $0x10] sm:$0xff]
  %v1331 = vld [vmem:[#allocation2 + $0x18] sm:$0xff]
  %v1332 = vld [vmem:[#allocation2 + $0x20] sm:$0xff]
  %v1333 = vld [vmem:[#allocation2 + $0x28] sm:$0xff]
  %v1334 = vld [vmem:[#allocation2 + $0x30] sm:$0xff]
  %v1335 = vld [vmem:[#allocation2 + $0x38] sm:$0xff]
  %v1336 = vld [vmem:[#allocation2 + $0x40] sm:$0xff]
  %v1337 = vld [vmem:[#allocation2 + $0x48] sm:$0xff]
  %v1338 = vld [vmem:[#allocation2 + $0x50] sm:$0xff]
  %v1339 = vld [vmem:[#allocation2 + $0x58] sm:$0xff]
  %v1340 = vld [vmem:[#allocation2 + $0x60] sm:$0xff]
  %v1341 = vld [vmem:[#allocation2 + $0x68] sm:$0xff]
  %v1342 = vld [vmem:[#allocation2 + $0x70] sm:$0xff]
  %v1343 = vld [vmem:[#allocation2 + $0x78] sm:$0xff]
  %v1344 = vld [vmem:[#allocation2 + $0x80] sm:$0xff]
  %v1345 = vld [vmem:[#allocation2 + $0x88] sm:$0xff]
  %v1346 = vld [vmem:[#allocation2 + $0x90] sm:$0xff]
  %v1347 = vld [vmem:[#allocation2 + $0x98] sm:$0xff]
  %v1348 = vld [vmem:[#allocation2 + $0xa0] sm:$0xff]
  %v1349 = vld [vmem:[#allocation2 + $0xa8] sm:$0xff]
  %v1350 = vld [vmem:[#allocation2 + $0xb0] sm:$0xff]
  %v1351 = vld [vmem:[#allocation2 + $0xb8] sm:$0xff]
  %v1352 = vld [vmem:[#allocation2 + $0xc0] sm:$0xff]
  %v1353 = vld [vmem:[#allocation2 + $0xc8] sm:$0xff]
  %v1354 = vld [vmem:[#allocation2 + $0xd0] sm:$0xff]
  %v1355 = vld [vmem:[#allocation2 + $0xd8] sm:$0xff]
  %v1356 = vld [vmem:[#allocation2 + $0xe0] sm:$0xff]
  %v1357 = vld [vmem:[#allocation2 + $0xe8] sm:$0xff]
  %v1358 = vld [vmem:[#allocation2 + $0xf0] sm:$0xff]
  %v1359 = vld [vmem:[#allocation2 + $0xf8] sm:$0xff]
  %v1360 = vld [vmem:[#allocation2 + $0x100] sm:$0xff]
  %v1361 = vld [vmem:[#allocation2 + $0x108] sm:$0xff]
  %v1362 = vld [vmem:[#allocation2 + $0x110] sm:$0xff]
  %v1363 = vld [vmem:[#allocation2 + $0x118] sm:$0xff]
  %v1364 = vld [vmem:[#allocation2 + $0x120] sm:$0x33]
  %v1365 = vld [vmem:[#allocation2 + $0x128] sm:$0x33]
  %v1366 = vld [vmem:[#allocation2 + $0x130] sm:$0x33]
  %v1367 = vld [vmem:[#allocation2 + $0x138] sm:$0x33]
  %v1368 = vld [vmem:[#allocation2 + $0x140] sm:$0x33]
  %v1369 = vld [vmem:[#allocation2 + $0x148] sm:$0x33]
  %v1370 = vld [vmem:[#allocation2 + $0x150] sm:$0x33]
  %v1371 = vld [vmem:[#allocation2 + $0x158] sm:$0x33]
  %v1372 = vld [vmem:[#allocation2 + $0x160] sm:$0x33]
  %v1373 = vld [vmem:[%s2] sm:$0xff]
  %1375 = vset.pattern.permute.xlu0 0
  %1376 = vperm.xlu0 %1375, %v1373
  %v1377 = vpop.permute.xlu0 %1376
  %v1424 = vunpack.c.l.b16 %v1328
  %v1425 = vunpack.c.h.b16 %v1328
  %v1426 = vunpack.c.l.b16 %v1329
  %v1427 = vunpack.c.h.b16 %v1329
  %v1428 = vunpack.c.l.b16 %v1330
  %v1429 = vunpack.c.h.b16 %v1330
  %v1430 = vunpack.c.l.b16 %v1331
  %v1431 = vunpack.c.h.b16 %v1331
  %v1432 = vunpack.c.l.b16 %v1332
  %v1433 = vunpack.c.h.b16 %v1332
  %v1434 = vunpack.c.l.b16 %v1333
  %v1435 = vunpack.c.h.b16 %v1333
  %v1436 = vunpack.c.l.b16 %v1334
  %v1437 = vunpack.c.h.b16 %v1334
  %v1438 = vunpack.c.l.b16 %v1335
  %v1439 = vunpack.c.h.b16 %v1335
  %v1440 = vunpack.c.l.b16 %v1336
  %v1441 = vunpack.c.h.b16 %v1336
  %v1442 = vunpack.c.l.b16 %v1337
  %v1443 = vunpack.c.h.b16 %v1337
  %v1444 = vunpack.c.l.b16 %v1338
  %v1445 = vunpack.c.h.b16 %v1338
  %v1446 = vunpack.c.l.b16 %v1339
  %v1447 = vunpack.c.h.b16 %v1339
  %v1448 = vunpack.c.l.b16 %v1340
  %v1449 = vunpack.c.h.b16 %v1340
  %v1450 = vunpack.c.l.b16 %v1341
  %v1451 = vunpack.c.h.b16 %v1341
  %v1452 = vunpack.c.l.b16 %v1342
  %v1453 = vunpack.c.h.b16 %v1342
  %v1454 = vunpack.c.l.b16 %v1343
  %v1455 = vunpack.c.h.b16 %v1343
  %v1456 = vunpack.c.l.b16 %v1344
  %v1457 = vunpack.c.h.b16 %v1344
  %v1458 = vunpack.c.l.b16 %v1345
  %v1459 = vunpack.c.h.b16 %v1345
  %v1460 = vunpack.c.l.b16 %v1346
  %v1461 = vunpack.c.h.b16 %v1346
  %v1462 = vunpack.c.l.b16 %v1347
  %v1463 = vunpack.c.h.b16 %v1347
  %v1464 = vunpack.c.l.b16 %v1348
  %v1465 = vunpack.c.h.b16 %v1348
  %v1466 = vunpack.c.l.b16 %v1349
  %v1467 = vunpack.c.h.b16 %v1349
  %v1468 = vunpack.c.l.b16 %v1350
  %v1469 = vunpack.c.h.b16 %v1350
  %v1470 = vunpack.c.l.b16 %v1351
  %v1471 = vunpack.c.h.b16 %v1351
  %v1472 = vunpack.c.l.b16 %v1352
  %v1473 = vunpack.c.h.b16 %v1352
  %v1474 = vunpack.c.l.b16 %v1353
  %v1475 = vunpack.c.h.b16 %v1353
  %v1476 = vunpack.c.l.b16 %v1354
  %v1477 = vunpack.c.h.b16 %v1354
  %v1478 = vunpack.c.l.b16 %v1355
  %v1479 = vunpack.c.h.b16 %v1355
  %v1480 = vunpack.c.l.b16 %v1356
  %v1481 = vunpack.c.h.b16 %v1356
  %v1482 = vunpack.c.l.b16 %v1357
  %v1483 = vunpack.c.h.b16 %v1357
  %v1484 = vunpack.c.l.b16 %v1358
  %v1485 = vunpack.c.h.b16 %v1358
  %v1486 = vunpack.c.l.b16 %v1359
  %v1487 = vunpack.c.h.b16 %v1359
  %v1488 = vunpack.c.l.b16 %v1360
  %v1489 = vunpack.c.h.b16 %v1360
  %v1490 = vunpack.c.l.b16 %v1361
  %v1491 = vunpack.c.h.b16 %v1361
  %v1492 = vunpack.c.l.b16 %v1362
  %v1493 = vunpack.c.h.b16 %v1362
  %v1494 = vunpack.c.l.b16 %v1363
  %v1495 = vunpack.c.h.b16 %v1363
  %v1496 = vunpack.c.l.b16 %v1364
  %v1497 = vunpack.c.h.b16 %v1364
  %v1498 = vunpack.c.l.b16 %v1365
  %v1499 = vunpack.c.h.b16 %v1365
  %v1500 = vunpack.c.l.b16 %v1366
  %v1501 = vunpack.c.h.b16 %v1366
  %v1502 = vunpack.c.l.b16 %v1367
  %v1503 = vunpack.c.h.b16 %v1367
  %v1504 = vunpack.c.l.b16 %v1368
  %v1505 = vunpack.c.h.b16 %v1368
  %v1506 = vunpack.c.l.b16 %v1369
  %v1507 = vunpack.c.h.b16 %v1369
  %v1508 = vunpack.c.l.b16 %v1370
  %v1509 = vunpack.c.h.b16 %v1370
  %v1510 = vunpack.c.l.b16 %v1371
  %v1511 = vunpack.c.h.b16 %v1371
  %v1512 = vunpack.c.l.b16 %v1372
  %v1513 = vunpack.c.h.b16 %v1372
  %v1514 = vpack.c.b16 %v1442, %v1424
  %v1515 = vpack.c.b16 %v1443, %v1425
  %v1516 = vpack.c.b16 %v1444, %v1426
  %v1517 = vpack.c.b16 %v1445, %v1427
  %v1518 = vpack.c.b16 %v1446, %v1428
  %v1519 = vpack.c.b16 %v1447, %v1429
  %v1520 = vpack.c.b16 %v1448, %v1430
  %v1521 = vpack.c.b16 %v1449, %v1431
  %v1522 = vpack.c.b16 %v1450, %v1432
  %v1523 = vpack.c.b16 %v1451, %v1433
  %v1524 = vpack.c.b16 %v1452, %v1434
  %v1525 = vpack.c.b16 %v1453, %v1435
  %v1526 = vpack.c.b16 %v1454, %v1436
  %v1527 = vpack.c.b16 %v1455, %v1437
  %v1528 = vpack.c.b16 %v1456, %v1438
  %v1529 = vpack.c.b16 %v1457, %v1439
  %v1530 = vpack.c.b16 %v1458, %v1440
  %v1531 = vpack.c.b16 %v1459, %v1441
  %v1532 = vpack.c.b16 %v1478, %v1460
  %v1533 = vpack.c.b16 %v1479, %v1461
  %v1534 = vpack.c.b16 %v1480, %v1462
  %v1535 = vpack.c.b16 %v1481, %v1463
  %v1536 = vpack.c.b16 %v1482, %v1464
  %v1537 = vpack.c.b16 %v1483, %v1465
  %v1538 = vpack.c.b16 %v1484, %v1466
  %v1539 = vpack.c.b16 %v1485, %v1467
  %v1540 = vpack.c.b16 %v1486, %v1468
  %v1541 = vpack.c.b16 %v1487, %v1469
  %v1542 = vpack.c.b16 %v1488, %v1470
  %v1543 = vpack.c.b16 %v1489, %v1471
  %v1544 = vpack.c.b16 %v1490, %v1472
  %v1545 = vpack.c.b16 %v1491, %v1473
  %v1546 = vpack.c.b16 %v1492, %v1474
  %v1547 = vpack.c.b16 %v1493, %v1475
  %v1548 = vpack.c.b16 %v1494, %v1476
  %v1549 = vpack.c.b16 %v1495, %v1477
  %v1550 = vpack.c.b16 %v1496, %v1496
  %v1551 = vpack.c.b16 %v1497, %v1497
  %v1552 = vpack.c.b16 %v1498, %v1498
  %v1553 = vpack.c.b16 %v1499, %v1499
  %v1554 = vpack.c.b16 %v1500, %v1500
  %v1555 = vpack.c.b16 %v1501, %v1501
  %v1556 = vpack.c.b16 %v1502, %v1502
  %v1557 = vpack.c.b16 %v1503, %v1503
  %v1558 = vpack.c.b16 %v1504, %v1504
  %v1559 = vpack.c.b16 %v1505, %v1505
  %v1560 = vpack.c.b16 %v1506, %v1506
  %v1561 = vpack.c.b16 %v1507, %v1507
  %v1562 = vpack.c.b16 %v1508, %v1508
  %v1563 = vpack.c.b16 %v1509, %v1509
  %v1564 = vpack.c.b16 %v1510, %v1510
  %v1565 = vpack.c.b16 %v1511, %v1511
  %v1566 = vpack.c.b16 %v1512, %v1512
  %v1567 = vpack.c.b16 %v1513, %v1513
  %vm1604 = vcmask 293888
  %v1606 = vsel %vm1604, %v1327, 0
  %vm1608 = vcmask 1041408
  %v1610 = vsel %vm1608, %v1550, 0
  %v1613 = vsel %vm1608, %v1551, 0
  %v1616 = vsel %vm1608, %v1552, 0
  %v1619 = vsel %vm1608, %v1553, 0
  %v1622 = vsel %vm1608, %v1554, 0
  %v1625 = vsel %vm1608, %v1555, 0
  %v1628 = vsel %vm1608, %v1556, 0
  %v1631 = vsel %vm1608, %v1557, 0
  %v1634 = vsel %vm1608, %v1558, 0
  %v1637 = vsel %vm1608, %v1559, 0
  %v1640 = vsel %vm1608, %v1560, 0
  %v1643 = vsel %vm1608, %v1561, 0
  %v1646 = vsel %vm1608, %v1562, 0
  %v1649 = vsel %vm1608, %v1563, 0
  %v1652 = vsel %vm1608, %v1564, 0
  %v1655 = vsel %vm1608, %v1565, 0
  %v1658 = vsel %vm1608, %v1566, 0
  %v1661 = vsel %vm1608, %v1567, 0
  %1663 = vmatprep.subr.bf16.mxu0 %v1515
  %1664 = vmatpush1.bf16.msra.mxu0 %v1514
  %1665 = vmatprep.subr.bf16.mxu0 %v1533
  %1666 = vmatpush1.bf16.msra.mxu0 %v1532
  %1667 = vmatprep.subr.bf16.mxu0 %v1613
  %1668 = vmatpush1.bf16.msra.mxu0 %v1610
  %1669 = vmatprep.subr.bf16.mxu0 0
  %1670 = vmatpush1.bf16.msra.mxu0 0
  %1671 = vmatprep.subr.bf16.mxu0 0
  %1672 = vmatpush1.bf16.msra.mxu0 0
  %1673 = vmatprep.subr.bf16.mxu0 0
  %1674 = vmatpush1.bf16.msra.mxu0 0
  %1675 = vmatprep.subr.bf16.mxu0 0
  %1676 = vmatpush1.bf16.msra.mxu0 0
  %1677 = vmatprep.subr.bf16.mxu0 0
  %1678 = vmatpush1.bf16.msra.mxu0 0
  %1679 = vmatprep.subr.bf16.mxu0 0
  %1680 = vmatpush1.bf16.msra.mxu0 0
  %1681 = vmatprep.subr.bf16.mxu0 0
  %1682 = vmatpush1.bf16.msra.mxu0 0
  %1683 = vmatprep.subr.bf16.mxu0 0
  %1684 = vmatpush1.bf16.msra.mxu0 0
  %1685 = vmatprep.subr.bf16.mxu0 0
  %1686 = vmatpush1.bf16.msra.mxu0 0
  %1687 = vmatprep.subr.bf16.mxu0 0
  %1688 = vmatpush1.bf16.msra.mxu0 0
  %1689 = vmatprep.subr.bf16.mxu0 0
  %1690 = vmatpush1.bf16.msra.mxu0 0
  %1691 = vmatprep.subr.bf16.mxu0 0
  %1692 = vmatpush1.bf16.msra.mxu0 0
  %1693 = vmatprep.subr.bf16.mxu0 0
  %1694 = vmatpush1.bf16.msra.mxu0 0
  %1695 = vmatprep.mubr.bf16.mxu0 0
  %1696 = vmatmul.mubr.bf16.gmra.mrb[0].mxu0 %v1606
  %v1697 = vpop.f32.mrb[0].mxu0
  %v1698 = vadd.f32 %v1377, %v1697
  %v1699 = vpop.f32.mrb[0].mxu0
  %v1700 = vadd.f32 %v1377, %v1699
  %v1701 = vpop.f32.mrb[0].mxu0
  %v1702 = vpop.f32.mrb[0].mxu0
  %1703 = vdwg.mxu0
  %1704 = vmatprep.subr.bf16.mxu0 %v1517
  %1705 = vmatpush1.bf16.msra.mxu0 %v1516
  %1706 = vmatprep.subr.bf16.mxu0 %v1535
  %1707 = vmatpush1.bf16.msra.mxu0 %v1534
  %1708 = vmatprep.subr.bf16.mxu0 %v1619
  %1709 = vmatpush1.bf16.msra.mxu0 %v1616
  %1710 = vmatprep.subr.bf16.mxu0 0
  %1711 = vmatpush1.bf16.msra.mxu0 0
  %1712 = vmatprep.subr.bf16.mxu0 0
  %1713 = vmatpush1.bf16.msra.mxu0 0
  %1714 = vmatprep.subr.bf16.mxu0 0
  %1715 = vmatpush1.bf16.msra.mxu0 0
  %1716 = vmatprep.subr.bf16.mxu0 0
  %1717 = vmatpush1.bf16.msra.mxu0 0
  %1718 = vmatprep.subr.bf16.mxu0 0
  %1719 = vmatpush1.bf16.msra.mxu0 0
  %1720 = vmatprep.subr.bf16.mxu0 0
  %1721 = vmatpush1.bf16.msra.mxu0 0
  %1722 = vmatprep.subr.bf16.mxu0 0
  %1723 = vmatpush1.bf16.msra.mxu0 0
  %1724 = vmatprep.subr.bf16.mxu0 0
  %1725 = vmatpush1.bf16.msra.mxu0 0
  %1726 = vmatprep.subr.bf16.mxu0 0
  %1727 = vmatpush1.bf16.msra.mxu0 0
  %1728 = vmatprep.subr.bf16.mxu0 0
  %1729 = vmatpush1.bf16.msra.mxu0 0
  %1730 = vmatprep.subr.bf16.mxu0 0
  %1731 = vmatpush1.bf16.msra.mxu0 0
  %1732 = vmatprep.subr.bf16.mxu0 0
  %1733 = vmatpush1.bf16.msra.mxu0 0
  %1734 = vmatprep.subr.bf16.mxu0 0
  %1735 = vmatpush1.bf16.msra.mxu0 0
  %1736 = vmatprep.mubr.bf16.mxu0 0
  %1737 = vmatmul.mubr.bf16.gmra.mrb[0].mxu0 %v1606
  %v1738 = vpop.f32.mrb[0].mxu0
  %v1739 = vadd.f32 %v1377, %v1738
  %v1740 = vpop.f32.mrb[0].mxu0
  %v1741 = vadd.f32 %v1377, %v1740
  %v1742 = vpop.f32.mrb[0].mxu0
  %v1743 = vpop.f32.mrb[0].mxu0
  %1744 = vdwg.mxu0
  %1745 = vmatprep.subr.bf16.mxu0 %v1519
  %1746 = vmatpush1.bf16.msra.mxu0 %v1518
  %1747 = vmatprep.subr.bf16.mxu0 %v1537
  %1748 = vmatpush1.bf16.msra.mxu0 %v1536
  %1749 = vmatprep.subr.bf16.mxu0 %v1625
  %1750 = vmatpush1.bf16.msra.mxu0 %v1622
  %1751 = vmatprep.subr.bf16.mxu0 0
  %1752 = vmatpush1.bf16.msra.mxu0 0
  %1753 = vmatprep.subr.bf16.mxu0 0
  %1754 = vmatpush1.bf16.msra.mxu0 0
  %1755 = vmatprep.subr.bf16.mxu0 0
  %1756 = vmatpush1.bf16.msra.mxu0 0
  %1757 = vmatprep.subr.bf16.mxu0 0
  %1758 = vmatpush1.bf16.msra.mxu0 0
  %1759 = vmatprep.subr.bf16.mxu0 0
  %1760 = vmatpush1.bf16.msra.mxu0 0
  %1761 = vmatprep.subr.bf16.mxu0 0
  %1762 = vmatpush1.bf16.msra.mxu0 0
  %1763 = vmatprep.subr.bf16.mxu0 0
  %1764 = vmatpush1.bf16.msra.mxu0 0
  %1765 = vmatprep.subr.bf16.mxu0 0
  %1766 = vmatpush1.bf16.msra.mxu0 0
  %1767 = vmatprep.subr.bf16.mxu0 0
  %1768 = vmatpush1.bf16.msra.mxu0 0
  %1769 = vmatprep.subr.bf16.mxu0 0
  %1770 = vmatpush1.bf16.msra.mxu0 0
  %1771 = vmatprep.subr.bf16.mxu0 0
  %1772 = vmatpush1.bf16.msra.mxu0 0
  %1773 = vmatprep.subr.bf16.mxu0 0
  %1774 = vmatpush1.bf16.msra.mxu0 0
  %1775 = vmatprep.subr.bf16.mxu0 0
  %1776 = vmatpush1.bf16.msra.mxu0 0
  %1777 = vmatprep.mubr.bf16.mxu0 0
  %1778 = vmatmul.mubr.bf16.gmra.mrb[0].mxu0 %v1606
  %v1779 = vpop.f32.mrb[0].mxu0
  %v1780 = vadd.f32 %v1377, %v1779
  %v1781 = vpop.f32.mrb[0].mxu0
  %v1782 = vadd.f32 %v1377, %v1781
  %v1783 = vpop.f32.mrb[0].mxu0
  %v1784 = vpop.f32.mrb[0].mxu0
  %1785 = vdwg.mxu0
  %1786 = vmatprep.subr.bf16.mxu0 %v1521
  %1787 = vmatpush1.bf16.msra.mxu0 %v1520
  %1788 = vmatprep.subr.bf16.mxu0 %v1539
  %1789 = vmatpush1.bf16.msra.mxu0 %v1538
  %1790 = vmatprep.subr.bf16.mxu0 %v1631
  %1791 = vmatpush1.bf16.msra.mxu0 %v1628
  %1792 = vmatprep.subr.bf16.mxu0 0
  %1793 = vmatpush1.bf16.msra.mxu0 0
  %1794 = vmatprep.subr.bf16.mxu0 0
  %1795 = vmatpush1.bf16.msra.mxu0 0
  %1796 = vmatprep.subr.bf16.mxu0 0
  %1797 = vmatpush1.bf16.msra.mxu0 0
  %1798 = vmatprep.subr.bf16.mxu0 0
  %1799 = vmatpush1.bf16.msra.mxu0 0
  %1800 = vmatprep.subr.bf16.mxu0 0
  %1801 = vmatpush1.bf16.msra.mxu0 0
  %1802 = vmatprep.subr.bf16.mxu0 0
  %1803 = vmatpush1.bf16.msra.mxu0 0
  %1804 = vmatprep.subr.bf16.mxu0 0
  %1805 = vmatpush1.bf16.msra.mxu0 0
  %1806 = vmatprep.subr.bf16.mxu0 0
  %1807 = vmatpush1.bf16.msra.mxu0 0
  %1808 = vmatprep.subr.bf16.mxu0 0
  %1809 = vmatpush1.bf16.msra.mxu0 0
  %1810 = vmatprep.subr.bf16.mxu0 0
  %1811 = vmatpush1.bf16.msra.mxu0 0
  %1812 = vmatprep.subr.bf16.mxu0 0
  %1813 = vmatpush1.bf16.msra.mxu0 0
  %1814 = vmatprep.subr.bf16.mxu0 0
  %1815 = vmatpush1.bf16.msra.mxu0 0
  %1816 = vmatprep.subr.bf16.mxu0 0
  %1817 = vmatpush1.bf16.msra.mxu0 0
  %1818 = vmatprep.mubr.bf16.mxu0 0
  %1819 = vmatmul.mubr.bf16.gmra.mrb[0].mxu0 %v1606
  %v1820 = vpop.f32.mrb[0].mxu0
  %v1821 = vadd.f32 %v1377, %v1820
  %v1822 = vpop.f32.mrb[0].mxu0
  %v1823 = vadd.f32 %v1377, %v1822
  %v1824 = vpop.f32.mrb[0].mxu0
  %v1825 = vpop.f32.mrb[0].mxu0
  %1826 = vdwg.mxu0
  %1827 = vmatprep.subr.bf16.mxu0 %v1523
  %1828 = vmatpush1.bf16.msra.mxu0 %v1522
  %1829 = vmatprep.subr.bf16.mxu0 %v1541
  %1830 = vmatpush1.bf16.msra.mxu0 %v1540
  %1831 = vmatprep.subr.bf16.mxu0 %v1637
  %1832 = vmatpush1.bf16.msra.mxu0 %v1634
  %1833 = vmatprep.subr.bf16.mxu0 0
  %1834 = vmatpush1.bf16.msra.mxu0 0
  %1835 = vmatprep.subr.bf16.mxu0 0
  %1836 = vmatpush1.bf16.msra.mxu0 0
  %1837 = vmatprep.subr.bf16.mxu0 0
  %1838 = vmatpush1.bf16.msra.mxu0 0
  %1839 = vmatprep.subr.bf16.mxu0 0
  %1840 = vmatpush1.bf16.msra.mxu0 0
  %1841 = vmatprep.subr.bf16.mxu0 0
  %1842 = vmatpush1.bf16.msra.mxu0 0
  %1843 = vmatprep.subr.bf16.mxu0 0
  %1844 = vmatpush1.bf16.msra.mxu0 0
  %1845 = vmatprep.subr.bf16.mxu0 0
  %1846 = vmatpush1.bf16.msra.mxu0 0
  %1847 = vmatprep.subr.bf16.mxu0 0
  %1848 = vmatpush1.bf16.msra.mxu0 0
  %1849 = vmatprep.subr.bf16.mxu0 0
  %1850 = vmatpush1.bf16.msra.mxu0 0
  %1851 = vmatprep.subr.bf16.mxu0 0
  %1852 = vmatpush1.bf16.msra.mxu0 0
  %1853 = vmatprep.subr.bf16.mxu0 0
  %1854 = vmatpush1.bf16.msra.mxu0 0
  %1855 = vmatprep.subr.bf16.mxu0 0
  %1856 = vmatpush1.bf16.msra.mxu0 0
  %1857 = vmatprep.subr.bf16.mxu0 0
  %1858 = vmatpush1.bf16.msra.mxu0 0
  %1859 = vmatprep.mubr.bf16.mxu0 0
  %1860 = vmatmul.mubr.bf16.gmra.mrb[0].mxu0 %v1606
  %v1861 = vpop.f32.mrb[0].mxu0
  %v1862 = vadd.f32 %v1377, %v1861
  %v1863 = vpop.f32.mrb[0].mxu0
  %v1864 = vadd.f32 %v1377, %v1863
  %v1865 = vpop.f32.mrb[0].mxu0
  %v1866 = vpop.f32.mrb[0].mxu0
  %1867 = vdwg.mxu0
  %1868 = vmatprep.subr.bf16.mxu0 %v1525
  %1869 = vmatpush1.bf16.msra.mxu0 %v1524
  %1870 = vmatprep.subr.bf16.mxu0 %v1543
  %1871 = vmatpush1.bf16.msra.mxu0 %v1542
  %1872 = vmatprep.subr.bf16.mxu0 %v1643
  %1873 = vmatpush1.bf16.msra.mxu0 %v1640
  %1874 = vmatprep.subr.bf16.mxu0 0
  %1875 = vmatpush1.bf16.msra.mxu0 0
  %1876 = vmatprep.subr.bf16.mxu0 0
  %1877 = vmatpush1.bf16.msra.mxu0 0
  %1878 = vmatprep.subr.bf16.mxu0 0
  %1879 = vmatpush1.bf16.msra.mxu0 0
  %1880 = vmatprep.subr.bf16.mxu0 0
  %1881 = vmatpush1.bf16.msra.mxu0 0
  %1882 = vmatprep.subr.bf16.mxu0 0
  %1883 = vmatpush1.bf16.msra.mxu0 0
  %1884 = vmatprep.subr.bf16.mxu0 0
  %1885 = vmatpush1.bf16.msra.mxu0 0
  %1886 = vmatprep.subr.bf16.mxu0 0
  %1887 = vmatpush1.bf16.msra.mxu0 0
  %1888 = vmatprep.subr.bf16.mxu0 0
  %1889 = vmatpush1.bf16.msra.mxu0 0
  %1890 = vmatprep.subr.bf16.mxu0 0
  %1891 = vmatpush1.bf16.msra.mxu0 0
  %1892 = vmatprep.subr.bf16.mxu0 0
  %1893 = vmatpush1.bf16.msra.mxu0 0
  %1894 = vmatprep.subr.bf16.mxu0 0
  %1895 = vmatpush1.bf16.msra.mxu0 0
  %1896 = vmatprep.subr.bf16.mxu0 0
  %1897 = vmatpush1.bf16.msra.mxu0 0
  %1898 = vmatprep.subr.bf16.mxu0 0
  %1899 = vmatpush1.bf16.msra.mxu0 0
  %1900 = vmatprep.mubr.bf16.mxu0 0
  %1901 = vmatmul.mubr.bf16.gmra.mrb[0].mxu0 %v1606
  %v1902 = vpop.f32.mrb[0].mxu0
  %v1903 = vadd.f32 %v1377, %v1902
  %v1904 = vpop.f32.mrb[0].mxu0
  %v1905 = vadd.f32 %v1377, %v1904
  %v1906 = vpop.f32.mrb[0].mxu0
  %v1907 = vpop.f32.mrb[0].mxu0
  %1908 = vdwg.mxu0
  %1909 = vmatprep.subr.bf16.mxu0 %v1527
  %1910 = vmatpush1.bf16.msra.mxu0 %v1526
  %1911 = vmatprep.subr.bf16.mxu0 %v1545
  %1912 = vmatpush1.bf16.msra.mxu0 %v1544
  %1913 = vmatprep.subr.bf16.mxu0 %v1649
  %1914 = vmatpush1.bf16.msra.mxu0 %v1646
  %1915 = vmatprep.subr.bf16.mxu0 0
  %1916 = vmatpush1.bf16.msra.mxu0 0
  %1917 = vmatprep.subr.bf16.mxu0 0
  %1918 = vmatpush1.bf16.msra.mxu0 0
  %1919 = vmatprep.subr.bf16.mxu0 0
  %1920 = vmatpush1.bf16.msra.mxu0 0
  %1921 = vmatprep.subr.bf16.mxu0 0
  %1922 = vmatpush1.bf16.msra.mxu0 0
  %1923 = vmatprep.subr.bf16.mxu0 0
  %1924 = vmatpush1.bf16.msra.mxu0 0
  %1925 = vmatprep.subr.bf16.mxu0 0
  %1926 = vmatpush1.bf16.msra.mxu0 0
  %1927 = vmatprep.subr.bf16.mxu0 0
  %1928 = vmatpush1.bf16.msra.mxu0 0
  %1929 = vmatprep.subr.bf16.mxu0 0
  %1930 = vmatpush1.bf16.msra.mxu0 0
  %1931 = vmatprep.subr.bf16.mxu0 0
  %1932 = vmatpush1.bf16.msra.mxu0 0
  %1933 = vmatprep.subr.bf16.mxu0 0
  %1934 = vmatpush1.bf16.msra.mxu0 0
  %1935 = vmatprep.subr.bf16.mxu0 0
  %1936 = vmatpush1.bf16.msra.mxu0 0
  %1937 = vmatprep.subr.bf16.mxu0 0
  %1938 = vmatpush1.bf16.msra.mxu0 0
  %1939 = vmatprep.subr.bf16.mxu0 0
  %1940 = vmatpush1.bf16.msra.mxu0 0
  %1941 = vmatprep.mubr.bf16.mxu0 0
  %1942 = vmatmul.mubr.bf16.gmra.mrb[0].mxu0 %v1606
  %v1943 = vpop.f32.mrb[0].mxu0
  %v1944 = vadd.f32 %v1377, %v1943
  %v1945 = vpop.f32.mrb[0].mxu0
  %v1946 = vadd.f32 %v1377, %v1945
  %v1947 = vpop.f32.mrb[0].mxu0
  %v1948 = vpop.f32.mrb[0].mxu0
  %1949 = vdwg.mxu0
  %1950 = vmatprep.subr.bf16.mxu0 %v1529
  %1951 = vmatpush1.bf16.msra.mxu0 %v1528
  %1952 = vmatprep.subr.bf16.mxu0 %v1547
  %1953 = vmatpush1.bf16.msra.mxu0 %v1546
  %1954 = vmatprep.subr.bf16.mxu0 %v1655
  %1955 = vmatpush1.bf16.msra.mxu0 %v1652
  %1956 = vmatprep.subr.bf16.mxu0 0
  %1957 = vmatpush1.bf16.msra.mxu0 0
  %1958 = vmatprep.subr.bf16.mxu0 0
  %1959 = vmatpush1.bf16.msra.mxu0 0
  %1960 = vmatprep.subr.bf16.mxu0 0
  %1961 = vmatpush1.bf16.msra.mxu0 0
  %1962 = vmatprep.subr.bf16.mxu0 0
  %1963 = vmatpush1.bf16.msra.mxu0 0
  %1964 = vmatprep.subr.bf16.mxu0 0
  %1965 = vmatpush1.bf16.msra.mxu0 0
  %1966 = vmatprep.subr.bf16.mxu0 0
  %1967 = vmatpush1.bf16.msra.mxu0 0
  %1968 = vmatprep.subr.bf16.mxu0 0
  %1969 = vmatpush1.bf16.msra.mxu0 0
  %1970 = vmatprep.subr.bf16.mxu0 0
  %1971 = vmatpush1.bf16.msra.mxu0 0
  %1972 = vmatprep.subr.bf16.mxu0 0
  %1973 = vmatpush1.bf16.msra.mxu0 0
  %1974 = vmatprep.subr.bf16.mxu0 0
  %1975 = vmatpush1.bf16.msra.mxu0 0
  %1976 = vmatprep.subr.bf16.mxu0 0
  %1977 = vmatpush1.bf16.msra.mxu0 0
  %1978 = vmatprep.subr.bf16.mxu0 0
  %1979 = vmatpush1.bf16.msra.mxu0 0
  %1980 = vmatprep.subr.bf16.mxu0 0
  %1981 = vmatpush1.bf16.msra.mxu0 0
  %1982 = vmatprep.mubr.bf16.mxu0 0
  %1983 = vmatmul.mubr.bf16.gmra.mrb[0].mxu0 %v1606
  %v1984 = vpop.f32.mrb[0].mxu0
  %v1985 = vadd.f32 %v1377, %v1984
  %v1986 = vpop.f32.mrb[0].mxu0
  %v1987 = vadd.f32 %v1377, %v1986
  %v1988 = vpop.f32.mrb[0].mxu0
  %v1989 = vpop.f32.mrb[0].mxu0
  %1990 = vdwg.mxu0
  %1991 = vmatprep.subr.bf16.mxu0 %v1531
  %1992 = vmatpush1.bf16.msra.mxu0 %v1530
  %1993 = vmatprep.subr.bf16.mxu0 %v1549
  %1994 = vmatpush1.bf16.msra.mxu0 %v1548
  %1995 = vmatprep.subr.bf16.mxu0 %v1661
  %1996 = vmatpush1.bf16.msra.mxu0 %v1658
  %1997 = vmatprep.subr.bf16.mxu0 0
  %1998 = vmatpush1.bf16.msra.mxu0 0
  %1999 = vmatprep.subr.bf16.mxu0 0
  %2000 = vmatpush1.bf16.msra.mxu0 0
  %2001 = vmatprep.subr.bf16.mxu0 0
  %2002 = vmatpush1.bf16.msra.mxu0 0
  %2003 = vmatprep.subr.bf16.mxu0 0
  %2004 = vmatpush1.bf16.msra.mxu0 0
  %2005 = vmatprep.subr.bf16.mxu0 0
  %2006 = vmatpush1.bf16.msra.mxu0 0
  %2007 = vmatprep.subr.bf16.mxu0 0
  %2008 = vmatpush1.bf16.msra.mxu0 0
  %2009 = vmatprep.subr.bf16.mxu0 0
  %2010 = vmatpush1.bf16.msra.mxu0 0
  %2011 = vmatprep.subr.bf16.mxu0 0
  %2012 = vmatpush1.bf16.msra.mxu0 0
  %2013 = vmatprep.subr.bf16.mxu0 0
  %2014 = vmatpush1.bf16.msra.mxu0 0
  %2015 = vmatprep.subr.bf16.mxu0 0
  %2016 = vmatpush1.bf16.msra.mxu0 0
  %2017 = vmatprep.subr.bf16.mxu0 0
  %2018 = vmatpush1.bf16.msra.mxu0 0
  %2019 = vmatprep.subr.bf16.mxu0 0
  %2020 = vmatpush1.bf16.msra.mxu0 0
  %2021 = vmatprep.subr.bf16.mxu0 0
  %2022 = vmatpush1.bf16.msra.mxu0 0
  %2023 = vmatprep.mubr.bf16.mxu0 0
  %2024 = vmatmul.mubr.bf16.gmra.mrb[0].mxu0 %v1606
  %v2025 = vpop.f32.mrb[0].mxu0
  %v2026 = vadd.f32 %v1377, %v2025
  %v2027 = vpop.f32.mrb[0].mxu0
  %v2028 = vadd.f32 %v1377, %v2027
  %v2029 = vpop.f32.mrb[0].mxu0
  %v2030 = vpop.f32.mrb[0].mxu0
  %2031 = vdwg.mxu0
  %2032 = vst [vmem:[%s3] sm:$0xff] %v1698
  %2033 = vst [vmem:[%s3 + $0x8] sm:$0xff] %v1700
  %2034 = vst [vmem:[%s3 + $0x10] sm:$0xff] %v1739
  %2035 = vst [vmem:[%s3 + $0x18] sm:$0xff] %v1741
  %2036 = vst [vmem:[%s3 + $0x20] sm:$0xff] %v1780
  %2037 = vst [vmem:[%s3 + $0x28] sm:$0xff] %v1782
  %2038 = vst [vmem:[%s3 + $0x30] sm:$0xff] %v1821
  %2039 = vst [vmem:[%s3 + $0x38] sm:$0xff] %v1823
  %2040 = vst [vmem:[%s3 + $0x40] sm:$0xff] %v1862
  %2041 = vst [vmem:[%s3 + $0x48] sm:$0xff] %v1864
  %2042 = vst [vmem:[%s3 + $0x50] sm:$0xff] %v1903
  %2043 = vst [vmem:[%s3 + $0x58] sm:$0xff] %v1905
  %2044 = vst [vmem:[%s3 + $0x60] sm:$0xff] %v1944
  %2045 = vst [vmem:[%s3 + $0x68] sm:$0xff] %v1946
  %2046 = vst [vmem:[%s3 + $0x70] sm:$0xff] %v1985
  %2047 = vst [vmem:[%s3 + $0x78] sm:$0xff] %v1987
  %2048 = vst [vmem:[%s3 + $0x80] sm:$0xff] %v2026
  %2049 = vst [vmem:[%s3 + $0x88] sm:$0xff] %v2028
  // Predicated region
  $region14: #{time_distributed_conv.1} parent=0 // pred_check
    _
  $region15: #{time_distributed_conv.1} parent=0 // pred_check_branch
    %2051 = sbr.rel (0) target = $region17
  $region16: #{time_distributed_conv.1} parent=0 // pred_region
    _
  $region17: #{time_distributed_conv.1} parent=0 // pred_fallthru
    _
  // Predicated region
  $region18: #{time_distributed_conv.1} parent=0 // pred_check
    _
  $region19: #{time_distributed_conv.1} parent=0 // pred_check_branch
    %2053 = sbr.rel (0) target = $region21
  $region20: #{time_distributed_conv.1} parent=0 // pred_region
    _
  $region21: #{time_distributed_conv.1} parent=0 // pred_fallthru
    _

</llo_original>
